<compile_context>
chip_gen: v6e
topology: v6e:2x2x1
jax: 0.10.0
libtpu: 0.0.40
codegen_flags: <defaults>
</compile_context>

<pallas_src>
import math
import functools

import jax
import jax.numpy as jnp
from jax import lax
from jax.experimental import pallas as pl
from jax.experimental.pallas import tpu as pltpu

# ---------------- Config (synthetic, small) ----------------
N_SIGNAL = 8     # config.n_signal
N_EMBD   = 32    # config.n_embd
N_LAYER  = 2     # config.n_layer
N_CLASS  = 4     # config.n_class
SEQ      = 8     # sequence length T
BATCH    = 2
LN_EPS   = 1e-5  # PyTorch LayerNorm default
UQ_MODE  = "combined"   # -> include_aleatoric, head outputs 2*n_class
NUM_CHUNKS = 1   # set to 2 on v7x (BATCH % 2 == 0) to use both TensorCores
HEAD_OUT_PAD = 128  # lane-dense padded output width (>= 2*N_CLASS)


# ---------------- in-kernel math helpers ----------------
def _layernorm(x, w, b):
    mu = jnp.mean(x, axis=-1, keepdims=True)
    var = jnp.mean((x - mu) ** 2, axis=-1, keepdims=True)
    return (x - mu) * lax.rsqrt(var + LN_EPS) * w + b


def _new_gelu(x):
    c = math.sqrt(2.0 / math.pi)
    return 0.5 * x * (1.0 + jnp.tanh(c * (x + 0.044715 * x ** 3)))


def _mm(a, b):
    """a @ b with bf16 operands and f32 accumulation (b is pre-transposed (in, out))."""
    return lax.dot_general(
        a.astype(jnp.bfloat16), b.astype(jnp.bfloat16),
        (((a.ndim - 1,), (0,)), ((), ())),
        preferred_element_type=jnp.float32)


def _batched_qkt(q, k):
    """(B, T, E) x (B, T, E) -> (B, T, T), contracting E, batching B."""
    return lax.dot_general(
        q.astype(jnp.bfloat16), k.astype(jnp.bfloat16),
        (((2,), (2,)), ((0,), (0,))),
        preferred_element_type=jnp.float32)


def _batched_pv(p, v):
    """(B, T, T) x (B, T, E) -> (B, T, E), contracting keys, batching B."""
    return lax.dot_general(
        p.astype(jnp.bfloat16), v.astype(jnp.bfloat16),
        (((2,), (1,)), ((0,), (0,))),
        preferred_element_type=jnp.float32)


# ---------------- Pallas kernel ----------------
def neuron_transformer_kernel(
    chunk_b,                                   # static: sequences per grid step
    x_ref,                                     # (1, chunk_b*T, n_signal) f32
    enc_w_ref, enc_b_ref,                      # (S, E) bf16, (1, E) f32
    ln1_w_ref, ln1_b_ref,                      # (L, E), (L, E) f32
    qkv_w_ref, qkv_b_ref,                      # (L, 3, E, E) bf16, (L, 3, 1, E) f32
    aproj_w_ref, aproj_b_ref,                  # (L, E, E) bf16, (L, E) f32
    ln2_w_ref, ln2_b_ref,                      # (L, E), (L, E) f32
    fc_w_ref, fc_b_ref,                        # (L, E, 4E) bf16, (L, 4E) f32
    mproj_w_ref, mproj_b_ref,                  # (L, 4E, E) bf16, (L, E) f32
    lnf_w_ref, lnf_b_ref,                      # (1, E), (1, E) f32
    head_w_ref,                                # (E, HEAD_OUT_PAD) bf16 (zero-padded)
    out_ref,                                   # (1, chunk_b, HEAD_OUT_PAD) f32
):
    rows = chunk_b * SEQ
    x = x_ref[0]                               # (rows, S) f32

    # signal encoder (embd dropout: identity at inference)
    h = _mm(x, enc_w_ref[...]) + enc_b_ref[...]            # (rows, E) f32

    scale = 1.0 / math.sqrt(N_EMBD)
    for l in range(N_LAYER):
        # ---- attention sublayer ----
        hn = _layernorm(h, ln1_w_ref[l:l + 1, :], ln1_b_ref[l:l + 1, :])
        # three small matmuls against leading-dim weight slices (no lane slicing)
        q = _mm(hn, qkv_w_ref[l, 0]) + qkv_b_ref[l, 0]                 # (rows, E)
        k = _mm(hn, qkv_w_ref[l, 1]) + qkv_b_ref[l, 1]
        v = _mm(hn, qkv_w_ref[l, 2]) + qkv_b_ref[l, 2]
        # batched per-sequence attention: block-diagonal by construction (no mask)
        qb = q.reshape(chunk_b, SEQ, N_EMBD)
        kb = k.reshape(chunk_b, SEQ, N_EMBD)
        vb = v.reshape(chunk_b, SEQ, N_EMBD)
        att = _batched_qkt(qb, kb) * scale                             # (B, T, T) f32
        m = jnp.max(att, axis=-1, keepdims=True)
        e = jnp.exp(att - m)
        p = e * pl.reciprocal(jnp.sum(e, axis=-1, keepdims=True), approx=True)
        # attn_dropout: identity (inference)
        y = _batched_pv(p, vb).reshape(rows, N_EMBD)                   # (rows, E)
        y = _mm(y, aproj_w_ref[l]) + aproj_b_ref[l:l + 1, :]
        # resid_dropout: identity (inference)
        h = h + y

        # ---- MLP sublayer ----
        hn = _layernorm(h, ln2_w_ref[l:l + 1, :], ln2_b_ref[l:l + 1, :])
        u = _mm(hn, fc_w_ref[l]) + fc_b_ref[l:l + 1, :]                # (rows, 4E)
        u = _new_gelu(u)
        u = _mm(u, mproj_w_ref[l]) + mproj_b_ref[l:l + 1, :]           # (rows, E)
        h = h + u

    # final layernorm + per-sequence max pool over T rows (SEQ=8 = f32 sublane tile)
    h = _layernorm(h, lnf_w_ref[...], lnf_b_ref[...])                  # (rows, E)
    pooled = jnp.max(h.reshape(chunk_b, SEQ, N_EMBD), axis=1)          # (chunk_b, E)

    # uncertainty head (no bias), combined/aleatoric mode, training=False
    logits = _mm(pooled, head_w_ref[...])                              # (chunk_b, 128)
    col = lax.broadcasted_iota(jnp.int32, logits.shape, 1)
    is_mu = col < N_CLASS
    # exp only sees sigma-lane values (mu lanes fed 0 -> exp=1, then discarded)
    sigma = jnp.exp(0.5 * jnp.where(is_mu, 0.0, logits))
    out_ref[0] = jnp.where(is_mu, logits, sigma)


# ---------------- wrapper ----------------
def _rep_spec(arr):
    nd = arr.ndim
    return pl.BlockSpec(arr.shape, lambda c, _nd=nd: (0,) * _nd)


def pack_kernel_params(p):
    """Pre-transpose weights to (in, out), split qkv per-component, cast to bf16."""
    bf = jnp.bfloat16
    # qkv: torch layout (L, 3E, E) = (layer, out, in) -> (L, 3, in, out)
    qkv_w = p["qkv_w"].reshape(N_LAYER, 3, N_EMBD, N_EMBD)
    qkv_w = jnp.transpose(qkv_w, (0, 1, 3, 2)).astype(bf)
    qkv_b = p["qkv_b"].reshape(N_LAYER, 3, 1, N_EMBD)
    # head: (2C, E) -> (E, 2C) zero-padded to lane-dense (E, 128)
    head_w = jnp.pad(p["head_w"].T,
                     ((0, 0), (0, HEAD_OUT_PAD - 2 * N_CLASS))).astype(bf)
    return [
        p["enc_w"].T.astype(bf), p["enc_b"],
        p["ln1_w"], p["ln1_b"],
        qkv_w, qkv_b,
        jnp.transpose(p["aproj_w"], (0, 2, 1)).astype(bf), p["aproj_b"],
        p["ln2_w"], p["ln2_b"],
        jnp.transpose(p["fc_w"], (0, 2, 1)).astype(bf), p["fc_b"],
        jnp.transpose(p["mproj_w"], (0, 2, 1)).astype(bf), p["mproj_b"],
        p["lnf_w"], p["lnf_b"],
        head_w,
    ]


def neuron_transformer(x, params, num_chunks=NUM_CHUNKS):
    """x: (B, T, n_signal) float32 -> (mu, sigma), each (B, n_class) float32."""
    B, T, S = x.shape
    assert T == SEQ and S == N_SIGNAL and B % num_chunks == 0
    chunk_b = B // num_chunks
    rows = chunk_b * SEQ

    # fold batch into the row (sublane) axis; chunk along leading axis for the grid
    x3 = x.reshape(num_chunks, rows, N_SIGNAL)

    weight_args = pack_kernel_params(params)

    in_specs = [pl.BlockSpec((1, rows, N_SIGNAL), lambda c: (c, 0, 0))]
    in_specs += [_rep_spec(w) for w in weight_args]

    out_shape = jax.ShapeDtypeStruct((num_chunks, chunk_b, HEAD_OUT_PAD), jnp.float32)
    out_specs = pl.BlockSpec((1, chunk_b, HEAD_OUT_PAD), lambda c: (c, 0, 0))

    out = pl.pallas_call(
        functools.partial(neuron_transformer_kernel, chunk_b),
        grid=(num_chunks,),
        in_specs=in_specs,
        out_specs=out_specs,
        out_shape=out_shape,
        compiler_params=pltpu.CompilerParams(dimension_semantics=("parallel",)),
    )(x3, *weight_args)

    out = out.reshape(B, HEAD_OUT_PAD)
    return out[:, :N_CLASS], out[:, N_CLASS:2 * N_CLASS]


# ---------------- deterministic parameter construction ----------------
def init_params(key):
    ks = jax.random.split(key, 8)
    std = 0.02
    std_proj = 0.02 / math.sqrt(2 * N_LAYER)   # *.c_proj.weight special init
    p = {
        # signal_encoder.c_proj.weight matches the "c_proj.weight" re-init rule
        "enc_w":   std_proj * jax.random.normal(ks[0], (N_EMBD, N_SIGNAL), jnp.float32),
        "enc_b":   jnp.zeros((1, N_EMBD), jnp.float32),
        "ln1_w":   jnp.ones((N_LAYER, N_EMBD), jnp.float32),
        "ln1_b":   jnp.zeros((N_LAYER, N_EMBD), jnp.float32),
        "qkv_w":   std * jax.random.normal(ks[1], (N_LAYER, 3 * N_EMBD, N_EMBD), jnp.float32),
        "qkv_b":   jnp.zeros((N_LAYER, 3 * N_EMBD), jnp.float32),
        "aproj_w": std_proj * jax.random.normal(ks[2], (N_LAYER, N_EMBD, N_EMBD), jnp.float32),
        "aproj_b": jnp.zeros((N_LAYER, N_EMBD), jnp.float32),
        "ln2_w":   jnp.ones((N_LAYER, N_EMBD), jnp.float32),
        "ln2_b":   jnp.zeros((N_LAYER, N_EMBD), jnp.float32),
        "fc_w":    std * jax.random.normal(ks[3], (N_LAYER, 4 * N_EMBD, N_EMBD), jnp.float32),
        "fc_b":    jnp.zeros((N_LAYER, 4 * N_EMBD), jnp.float32),
        "mproj_w": std_proj * jax.random.normal(ks[4], (N_LAYER, N_EMBD, 4 * N_EMBD), jnp.float32),
        "mproj_b": jnp.zeros((N_LAYER, N_EMBD), jnp.float32),
        "lnf_w":   jnp.ones((1, N_EMBD), jnp.float32),
        "lnf_b":   jnp.zeros((1, N_EMBD), jnp.float32),
        # UncertaintyHead.head ends in "head.weight" -> keeps std=0.02
        "head_w":  std * jax.random.normal(ks[5], (2 * N_CLASS, N_EMBD), jnp.float32),
    }
    return p


# ---------------- pure-JAX f32 reference (for self-check) ----------------
def reference_forward(x, p):
    def ln(v, w, b):
        m = jnp.mean(v, -1, keepdims=True)
        var = jnp.mean((v - m) ** 2, -1, keepdims=True)
        return (v - m) / jnp.sqrt(var + LN_EPS) * w + b

    h = jnp.einsum("bts,es->bte", x, p["enc_w"]) + p["enc_b"][0]
    for l in range(N_LAYER):
        hn = ln(h, p["ln1_w"][l], p["ln1_b"][l])
        qkv = jnp.einsum("bte,fe->btf", hn, p["qkv_w"][l]) + p["qkv_b"][l]
        q, k, v = jnp.split(qkv, 3, axis=-1)
        att = jax.nn.softmax(jnp.einsum("bqe,bke->bqk", q, k) / math.sqrt(N_EMBD), -1)
        y = jnp.einsum("bqk,bke->bqe", att, v)
        y = jnp.einsum("bte,fe->btf", y, p["aproj_w"][l]) + p["aproj_b"][l]
        h = h + y
        hn = ln(h, p["ln2_w"][l], p["ln2_b"][l])
        u = jnp.einsum("bte,fe->btf", hn, p["fc_w"][l]) + p["fc_b"][l]
        u = 0.5 * u * (1.0 + jnp.tanh(math.sqrt(2.0 / math.pi) * (u + 0.044715 * u ** 3)))
        u = jnp.einsum("btf,ef->bte", u, p["mproj_w"][l]) + p["mproj_b"][l]
        h = h + u
    h = ln(h, p["lnf_w"][0], p["lnf_b"][0])
    pooled = jnp.max(h, axis=1)
    logits = pooled @ p["head_w"].T
    mu, logvar = logits[:, :N_CLASS], logits[:, N_CLASS:]
    return mu, jnp.exp(0.5 * logvar)   # == sqrt(exp(logvar)), numerically safer


if __name__ == "__main__":
    key = jax.random.PRNGKey(0)
    k_x, k_p = jax.random.split(key)
    x = jax.random.normal(k_x, (BATCH, SEQ, N_SIGNAL), jnp.float32)
    params = init_params(k_p)

    mu, sigma = neuron_transformer(x, params)
    jax.block_until_ready((mu, sigma))

    mu_ref, sigma_ref = reference_forward(x, params)
    # kernel runs matmuls in bf16 (f32 accumulation) -> loosened tolerance vs f32 reference
    assert mu.shape == (BATCH, N_CLASS) and sigma.shape == (BATCH, N_CLASS)
    assert jnp.allclose(mu, mu_ref, rtol=2e-2, atol=2e-2), "mu mismatch"
    assert jnp.allclose(sigma, sigma_ref, rtol=2e-2, atol=2e-2), "sigma mismatch"

    print("KERNEL_OK")
</pallas_src>

<mosaic_0001>
module attributes {stable_mosaic.version = 11 : i64} {
  func.func @neuron_transformer_kernel(%arg0: i32, %arg1: memref<1x16x8xf32, #tpu.memory_space<vmem>>, %arg2: memref<8x32xbf16, #tpu.memory_space<vmem>>, %arg3: memref<1x32xf32, #tpu.memory_space<vmem>>, %arg4: memref<2x32xf32, #tpu.memory_space<vmem>>, %arg5: memref<2x32xf32, #tpu.memory_space<vmem>>, %arg6: memref<2x3x32x32xbf16, #tpu.memory_space<vmem>>, %arg7: memref<2x3x1x32xf32, #tpu.memory_space<vmem>>, %arg8: memref<2x32x32xbf16, #tpu.memory_space<vmem>>, %arg9: memref<2x32xf32, #tpu.memory_space<vmem>>, %arg10: memref<2x32xf32, #tpu.memory_space<vmem>>, %arg11: memref<2x32xf32, #tpu.memory_space<vmem>>, %arg12: memref<2x32x128xbf16, #tpu.memory_space<vmem>>, %arg13: memref<2x128xf32, #tpu.memory_space<vmem>>, %arg14: memref<2x128x32xbf16, #tpu.memory_space<vmem>>, %arg15: memref<2x32xf32, #tpu.memory_space<vmem>>, %arg16: memref<1x32xf32, #tpu.memory_space<vmem>>, %arg17: memref<1x32xf32, #tpu.memory_space<vmem>>, %arg18: memref<32x128xbf16, #tpu.memory_space<vmem>>, %arg19: memref<1x2x128xf32, #tpu.memory_space<vmem>>) attributes {dimension_semantics = [#tpu.dimension_semantics<parallel>], iteration_bounds = array<i64: 1>, scalar_prefetch = 0 : i64, scratch_operands = 0 : i64, tpu.core_type = #tpu.core_type<tc>, window_params = [{transform_indices = @transform_0, window_bounds = array<i64: 1, 16, 8>}, {pipeline_mode = #tpu.pipeline_mode<synchronous>, transform_indices = @transform_1, window_bounds = array<i64: 8, 32>}, {pipeline_mode = #tpu.pipeline_mode<synchronous>, transform_indices = @transform_2, window_bounds = array<i64: 1, 32>}, {pipeline_mode = #tpu.pipeline_mode<synchronous>, transform_indices = @transform_3, window_bounds = array<i64: 2, 32>}, {pipeline_mode = #tpu.pipeline_mode<synchronous>, transform_indices = @transform_4, window_bounds = array<i64: 2, 32>}, {pipeline_mode = #tpu.pipeline_mode<synchronous>, transform_indices = @transform_5, window_bounds = array<i64: 2, 3, 32, 32>}, {pipeline_mode = #tpu.pipeline_mode<synchronous>, transform_indices = @transform_6, window_bounds = array<i64: 2, 3, 1, 32>}, {pipeline_mode = #tpu.pipeline_mode<synchronous>, transform_indices = @transform_7, window_bounds = array<i64: 2, 32, 32>}, {pipeline_mode = #tpu.pipeline_mode<synchronous>, transform_indices = @transform_8, window_bounds = array<i64: 2, 32>}, {pipeline_mode = #tpu.pipeline_mode<synchronous>, transform_indices = @transform_9, window_bounds = array<i64: 2, 32>}, {pipeline_mode = #tpu.pipeline_mode<synchronous>, transform_indices = @transform_10, window_bounds = array<i64: 2, 32>}, {pipeline_mode = #tpu.pipeline_mode<synchronous>, transform_indices = @transform_11, window_bounds = array<i64: 2, 32, 128>}, {pipeline_mode = #tpu.pipeline_mode<synchronous>, transform_indices = @transform_12, window_bounds = array<i64: 2, 128>}, {pipeline_mode = #tpu.pipeline_mode<synchronous>, transform_indices = @transform_13, window_bounds = array<i64: 2, 128, 32>}, {pipeline_mode = #tpu.pipeline_mode<synchronous>, transform_indices = @transform_14, window_bounds = array<i64: 2, 32>}, {pipeline_mode = #tpu.pipeline_mode<synchronous>, transform_indices = @transform_15, window_bounds = array<i64: 1, 32>}, {pipeline_mode = #tpu.pipeline_mode<synchronous>, transform_indices = @transform_16, window_bounds = array<i64: 1, 32>}, {pipeline_mode = #tpu.pipeline_mode<synchronous>, transform_indices = @transform_17, window_bounds = array<i64: 32, 128>}, {transform_indices = @transform_18, window_bounds = array<i64: 1, 2, 128>}]} {
    %c0 = arith.constant 0 : index
    %c0_0 = arith.constant 0 : index
    %c0_1 = arith.constant 0 : index
    %0 = vector.load %arg1[%c0, %c0_0, %c0_1] : memref<1x16x8xf32, #tpu.memory_space<vmem>>, vector<1x16x8xf32>
    %1 = vector.shape_cast %0 : vector<1x16x8xf32> to vector<16x8xf32>
    %c0_2 = arith.constant 0 : index
    %c0_3 = arith.constant 0 : index
    %2 = vector.load %arg2[%c0_2, %c0_3] : memref<8x32xbf16, #tpu.memory_space<vmem>>, vector<8x32xbf16>
    %3 = arith.truncf %1 : vector<16x8xf32> to vector<16x8xbf16>
    %cst = arith.constant dense<0.000000e+00> : vector<16x32xf32>
    %4 = tpu.matmul %3, %2, %cst {dimension_numbers = #tpu.dot_dimension_numbers<[1], [0], [0], [1], [0, 0, 1, 1], [], []>} : vector<16x8xbf16>, vector<8x32xbf16>, vector<16x32xf32> -> vector<16x32xf32>
    %c0_4 = arith.constant 0 : index
    %c0_5 = arith.constant 0 : index
    %5 = vector.load %arg3[%c0_4, %c0_5] : memref<1x32xf32, #tpu.memory_space<vmem>>, vector<1x32xf32>
    %6 = vector.broadcast %5 : vector<1x32xf32> to vector<16x32xf32>
    %7 = arith.addf %4, %6 : vector<16x32xf32>
    %c0_6 = arith.constant 0 : index
    %c0_7 = arith.constant 0 : index
    %8 = vector.load %arg4[%c0_6, %c0_7] : memref<2x32xf32, #tpu.memory_space<vmem>>, vector<1x32xf32>
    %c0_8 = arith.constant 0 : index
    %c0_9 = arith.constant 0 : index
    %9 = vector.load %arg5[%c0_8, %c0_9] : memref<2x32xf32, #tpu.memory_space<vmem>>, vector<1x32xf32>
    %cst_10 = arith.constant dense<0.000000e+00> : vector<16xf32>
    %10 = vector.multi_reduction <add>, %7, %cst_10 [1] : vector<16x32xf32> to vector<16xf32>
    %11 = vector.shape_cast %10 : vector<16xf32> to vector<16x1xf32>
    %cst_11 = arith.constant 3.200000e+01 : f32
    %12 = vector.broadcast %cst_11 : f32 to vector<16x1xf32>
    %13 = arith.divf %11, %12 : vector<16x1xf32>
    %14 = vector.broadcast %13 : vector<16x1xf32> to vector<16x32xf32>
    %15 = arith.subf %7, %14 : vector<16x32xf32>
    %16 = arith.mulf %15, %15 : vector<16x32xf32>
    %cst_12 = arith.constant dense<0.000000e+00> : vector<16xf32>
    %17 = vector.multi_reduction <add>, %16, %cst_12 [1] : vector<16x32xf32> to vector<16xf32>
    %18 = vector.shape_cast %17 : vector<16xf32> to vector<16x1xf32>
    %cst_13 = arith.constant 3.200000e+01 : f32
    %19 = vector.broadcast %cst_13 : f32 to vector<16x1xf32>
    %20 = arith.divf %18, %19 : vector<16x1xf32>
    %21 = vector.broadcast %13 : vector<16x1xf32> to vector<16x32xf32>
    %22 = arith.subf %7, %21 : vector<16x32xf32>
    %cst_14 = arith.constant 9.99999974E-6 : f32
    %23 = vector.broadcast %cst_14 : f32 to vector<16x1xf32>
    %24 = arith.addf %20, %23 : vector<16x1xf32>
    %25 = math.rsqrt %24 : vector<16x1xf32>
    %26 = vector.broadcast %25 : vector<16x1xf32> to vector<16x32xf32>
    %27 = arith.mulf %22, %26 : vector<16x32xf32>
    %28 = vector.broadcast %8 : vector<1x32xf32> to vector<16x32xf32>
    %29 = arith.mulf %27, %28 : vector<16x32xf32>
    %30 = vector.broadcast %9 : vector<1x32xf32> to vector<16x32xf32>
    %31 = arith.addf %29, %30 : vector<16x32xf32>
    %c0_15 = arith.constant 0 : index
    %c0_16 = arith.constant 0 : index
    %c0_17 = arith.constant 0 : index
    %c0_18 = arith.constant 0 : index
    %32 = vector.load %arg6[%c0_15, %c0_16, %c0_17, %c0_18] : memref<2x3x32x32xbf16, #tpu.memory_space<vmem>>, vector<1x1x32x32xbf16>
    %33 = vector.shape_cast %32 : vector<1x1x32x32xbf16> to vector<32x32xbf16>
    %34 = arith.truncf %31 : vector<16x32xf32> to vector<16x32xbf16>
    %cst_19 = arith.constant dense<0.000000e+00> : vector<16x32xf32>
    %35 = tpu.matmul %34, %33, %cst_19 {dimension_numbers = #tpu.dot_dimension_numbers<[1], [0], [0], [1], [0, 0, 1, 1], [], []>} : vector<16x32xbf16>, vector<32x32xbf16>, vector<16x32xf32> -> vector<16x32xf32>
    %c0_20 = arith.constant 0 : index
    %c0_21 = arith.constant 0 : index
    %c0_22 = arith.constant 0 : index
    %c0_23 = arith.constant 0 : index
    %36 = vector.load %arg7[%c0_20, %c0_21, %c0_22, %c0_23] : memref<2x3x1x32xf32, #tpu.memory_space<vmem>>, vector<1x1x1x32xf32>
    %37 = vector.shape_cast %36 : vector<1x1x1x32xf32> to vector<1x32xf32>
    %38 = vector.broadcast %37 : vector<1x32xf32> to vector<16x32xf32>
    %39 = arith.addf %35, %38 : vector<16x32xf32>
    %c0_24 = arith.constant 0 : index
    %c1 = arith.constant 1 : index
    %c0_25 = arith.constant 0 : index
    %c0_26 = arith.constant 0 : index
    %40 = vector.load %arg6[%c0_24, %c1, %c0_25, %c0_26] : memref<2x3x32x32xbf16, #tpu.memory_space<vmem>>, vector<1x1x32x32xbf16>
    %41 = vector.shape_cast %40 : vector<1x1x32x32xbf16> to vector<32x32xbf16>
    %42 = arith.truncf %31 : vector<16x32xf32> to vector<16x32xbf16>
    %cst_27 = arith.constant dense<0.000000e+00> : vector<16x32xf32>
    %43 = tpu.matmul %42, %41, %cst_27 {dimension_numbers = #tpu.dot_dimension_numbers<[1], [0], [0], [1], [0, 0, 1, 1], [], []>} : vector<16x32xbf16>, vector<32x32xbf16>, vector<16x32xf32> -> vector<16x32xf32>
    %c0_28 = arith.constant 0 : index
    %c1_29 = arith.constant 1 : index
    %c0_30 = arith.constant 0 : index
    %c0_31 = arith.constant 0 : index
    %44 = vector.load %arg7[%c0_28, %c1_29, %c0_30, %c0_31] : memref<2x3x1x32xf32, #tpu.memory_space<vmem>>, vector<1x1x1x32xf32>
    %45 = vector.shape_cast %44 : vector<1x1x1x32xf32> to vector<1x32xf32>
    %46 = vector.broadcast %45 : vector<1x32xf32> to vector<16x32xf32>
    %47 = arith.addf %43, %46 : vector<16x32xf32>
    %c0_32 = arith.constant 0 : index
    %c2 = arith.constant 2 : index
    %c0_33 = arith.constant 0 : index
    %c0_34 = arith.constant 0 : index
    %48 = vector.load %arg6[%c0_32, %c2, %c0_33, %c0_34] : memref<2x3x32x32xbf16, #tpu.memory_space<vmem>>, vector<1x1x32x32xbf16>
    %49 = vector.shape_cast %48 : vector<1x1x32x32xbf16> to vector<32x32xbf16>
    %50 = arith.truncf %31 : vector<16x32xf32> to vector<16x32xbf16>
    %cst_35 = arith.constant dense<0.000000e+00> : vector<16x32xf32>
    %51 = tpu.matmul %50, %49, %cst_35 {dimension_numbers = #tpu.dot_dimension_numbers<[1], [0], [0], [1], [0, 0, 1, 1], [], []>} : vector<16x32xbf16>, vector<32x32xbf16>, vector<16x32xf32> -> vector<16x32xf32>
    %c0_36 = arith.constant 0 : index
    %c2_37 = arith.constant 2 : index
    %c0_38 = arith.constant 0 : index
    %c0_39 = arith.constant 0 : index
    %52 = vector.load %arg7[%c0_36, %c2_37, %c0_38, %c0_39] : memref<2x3x1x32xf32, #tpu.memory_space<vmem>>, vector<1x1x1x32xf32>
    %53 = vector.shape_cast %52 : vector<1x1x1x32xf32> to vector<1x32xf32>
    %54 = vector.broadcast %53 : vector<1x32xf32> to vector<16x32xf32>
    %55 = arith.addf %51, %54 : vector<16x32xf32>
    %56 = vector.shape_cast %39 : vector<16x32xf32> to vector<2x8x32xf32>
    %57 = vector.shape_cast %47 : vector<16x32xf32> to vector<2x8x32xf32>
    %58 = vector.shape_cast %55 : vector<16x32xf32> to vector<2x8x32xf32>
    %59 = arith.truncf %56 : vector<2x8x32xf32> to vector<2x8x32xbf16>
    %60 = arith.truncf %57 : vector<2x8x32xf32> to vector<2x8x32xbf16>
    %cst_40 = arith.constant dense<0.000000e+00> : vector<2x8x8xf32>
    %61 = tpu.matmul %59, %60, %cst_40 {dimension_numbers = #tpu.dot_dimension_numbers<[2], [2], [1], [1], [0, 0, 0, 1, 1, 1], [0], [0]>} : vector<2x8x32xbf16>, vector<2x8x32xbf16>, vector<2x8x8xf32> -> vector<2x8x8xf32>
    %cst_41 = arith.constant 0.176776692 : f32
    %62 = vector.broadcast %cst_41 : f32 to vector<2x8x8xf32>
    %63 = arith.mulf %61, %62 : vector<2x8x8xf32>
    %cst_42 = arith.constant dense<0xFF800000> : vector<2x8xf32>
    %64 = vector.multi_reduction <maximumf>, %63, %cst_42 [2] : vector<2x8x8xf32> to vector<2x8xf32>
    %65 = vector.shape_cast %64 : vector<2x8xf32> to vector<2x8x1xf32>
    %66 = vector.broadcast %65 : vector<2x8x1xf32> to vector<2x8x8xf32>
    %67 = arith.subf %63, %66 : vector<2x8x8xf32>
    %68 = math.exp %67 : vector<2x8x8xf32>
    %cst_43 = arith.constant dense<0.000000e+00> : vector<2x8xf32>
    %69 = vector.multi_reduction <add>, %68, %cst_43 [2] : vector<2x8x8xf32> to vector<2x8xf32>
    %70 = vector.shape_cast %69 : vector<2x8xf32> to vector<2x8x1xf32>
    %71 = tpu.reciprocal %70 {approx = true} : vector<2x8x1xf32> -> vector<2x8x1xf32>
    %72 = vector.broadcast %71 : vector<2x8x1xf32> to vector<2x8x8xf32>
    %73 = arith.mulf %68, %72 : vector<2x8x8xf32>
    %74 = arith.truncf %73 : vector<2x8x8xf32> to vector<2x8x8xbf16>
    %75 = arith.truncf %58 : vector<2x8x32xf32> to vector<2x8x32xbf16>
    %cst_44 = arith.constant dense<0.000000e+00> : vector<2x8x32xf32>
    %76 = tpu.matmul %74, %75, %cst_44 {dimension_numbers = #tpu.dot_dimension_numbers<[2], [1], [1], [2], [0, 0, 0, 1, 1, 2], [0], [0]>} : vector<2x8x8xbf16>, vector<2x8x32xbf16>, vector<2x8x32xf32> -> vector<2x8x32xf32>
    %77 = vector.shape_cast %76 : vector<2x8x32xf32> to vector<16x32xf32>
    %c0_45 = arith.constant 0 : index
    %c0_46 = arith.constant 0 : index
    %c0_47 = arith.constant 0 : index
    %78 = vector.load %arg8[%c0_45, %c0_46, %c0_47] : memref<2x32x32xbf16, #tpu.memory_space<vmem>>, vector<1x32x32xbf16>
    %79 = vector.shape_cast %78 : vector<1x32x32xbf16> to vector<32x32xbf16>
    %80 = arith.truncf %77 : vector<16x32xf32> to vector<16x32xbf16>
    %cst_48 = arith.constant dense<0.000000e+00> : vector<16x32xf32>
    %81 = tpu.matmul %80, %79, %cst_48 {dimension_numbers = #tpu.dot_dimension_numbers<[1], [0], [0], [1], [0, 0, 1, 1], [], []>} : vector<16x32xbf16>, vector<32x32xbf16>, vector<16x32xf32> -> vector<16x32xf32>
    %c0_49 = arith.constant 0 : index
    %c0_50 = arith.constant 0 : index
    %82 = vector.load %arg9[%c0_49, %c0_50] : memref<2x32xf32, #tpu.memory_space<vmem>>, vector<1x32xf32>
    %83 = vector.broadcast %82 : vector<1x32xf32> to vector<16x32xf32>
    %84 = arith.addf %81, %83 : vector<16x32xf32>
    %85 = arith.addf %7, %84 : vector<16x32xf32>
    %c0_51 = arith.constant 0 : index
    %c0_52 = arith.constant 0 : index
    %86 = vector.load %arg10[%c0_51, %c0_52] : memref<2x32xf32, #tpu.memory_space<vmem>>, vector<1x32xf32>
    %c0_53 = arith.constant 0 : index
    %c0_54 = arith.constant 0 : index
    %87 = vector.load %arg11[%c0_53, %c0_54] : memref<2x32xf32, #tpu.memory_space<vmem>>, vector<1x32xf32>
    %cst_55 = arith.constant dense<0.000000e+00> : vector<16xf32>
    %88 = vector.multi_reduction <add>, %85, %cst_55 [1] : vector<16x32xf32> to vector<16xf32>
    %89 = vector.shape_cast %88 : vector<16xf32> to vector<16x1xf32>
    %cst_56 = arith.constant 3.200000e+01 : f32
    %90 = vector.broadcast %cst_56 : f32 to vector<16x1xf32>
    %91 = arith.divf %89, %90 : vector<16x1xf32>
    %92 = vector.broadcast %91 : vector<16x1xf32> to vector<16x32xf32>
    %93 = arith.subf %85, %92 : vector<16x32xf32>
    %94 = arith.mulf %93, %93 : vector<16x32xf32>
    %cst_57 = arith.constant dense<0.000000e+00> : vector<16xf32>
    %95 = vector.multi_reduction <add>, %94, %cst_57 [1] : vector<16x32xf32> to vector<16xf32>
    %96 = vector.shape_cast %95 : vector<16xf32> to vector<16x1xf32>
    %cst_58 = arith.constant 3.200000e+01 : f32
    %97 = vector.broadcast %cst_58 : f32 to vector<16x1xf32>
    %98 = arith.divf %96, %97 : vector<16x1xf32>
    %99 = vector.broadcast %91 : vector<16x1xf32> to vector<16x32xf32>
    %100 = arith.subf %85, %99 : vector<16x32xf32>
    %cst_59 = arith.constant 9.99999974E-6 : f32
    %101 = vector.broadcast %cst_59 : f32 to vector<16x1xf32>
    %102 = arith.addf %98, %101 : vector<16x1xf32>
    %103 = math.rsqrt %102 : vector<16x1xf32>
    %104 = vector.broadcast %103 : vector<16x1xf32> to vector<16x32xf32>
    %105 = arith.mulf %100, %104 : vector<16x32xf32>
    %106 = vector.broadcast %86 : vector<1x32xf32> to vector<16x32xf32>
    %107 = arith.mulf %105, %106 : vector<16x32xf32>
    %108 = vector.broadcast %87 : vector<1x32xf32> to vector<16x32xf32>
    %109 = arith.addf %107, %108 : vector<16x32xf32>
    %c0_60 = arith.constant 0 : index
    %c0_61 = arith.constant 0 : index
    %c0_62 = arith.constant 0 : index
    %110 = vector.load %arg12[%c0_60, %c0_61, %c0_62] : memref<2x32x128xbf16, #tpu.memory_space<vmem>>, vector<1x32x128xbf16>
    %111 = vector.shape_cast %110 : vector<1x32x128xbf16> to vector<32x128xbf16>
    %112 = arith.truncf %109 : vector<16x32xf32> to vector<16x32xbf16>
    %cst_63 = arith.constant dense<0.000000e+00> : vector<16x128xf32>
    %113 = tpu.matmul %112, %111, %cst_63 {dimension_numbers = #tpu.dot_dimension_numbers<[1], [0], [0], [1], [0, 0, 1, 1], [], []>} : vector<16x32xbf16>, vector<32x128xbf16>, vector<16x128xf32> -> vector<16x128xf32>
    %c0_64 = arith.constant 0 : index
    %c0_65 = arith.constant 0 : index
    %114 = vector.load %arg13[%c0_64, %c0_65] : memref<2x128xf32, #tpu.memory_space<vmem>>, vector<1x128xf32>
    %115 = vector.broadcast %114 : vector<1x128xf32> to vector<16x128xf32>
    %116 = arith.addf %113, %115 : vector<16x128xf32>
    %cst_66 = arith.constant 5.000000e-01 : f32
    %117 = vector.broadcast %cst_66 : f32 to vector<16x128xf32>
    %118 = arith.mulf %117, %116 : vector<16x128xf32>
    %119 = arith.mulf %116, %116 : vector<16x128xf32>
    %120 = arith.mulf %116, %119 : vector<16x128xf32>
    %cst_67 = arith.constant 4.471500e-02 : f32
    %121 = vector.broadcast %cst_67 : f32 to vector<16x128xf32>
    %122 = arith.mulf %121, %120 : vector<16x128xf32>
    %123 = arith.addf %116, %122 : vector<16x128xf32>
    %cst_68 = arith.constant 0.797884583 : f32
    %124 = vector.broadcast %cst_68 : f32 to vector<16x128xf32>
    %125 = arith.mulf %124, %123 : vector<16x128xf32>
    %126 = math.tanh %125 : vector<16x128xf32>
    %cst_69 = arith.constant 1.000000e+00 : f32
    %127 = vector.broadcast %cst_69 : f32 to vector<16x128xf32>
    %128 = arith.addf %127, %126 : vector<16x128xf32>
    %129 = arith.mulf %118, %128 : vector<16x128xf32>
    %c0_70 = arith.constant 0 : index
    %c0_71 = arith.constant 0 : index
    %c0_72 = arith.constant 0 : index
    %130 = vector.load %arg14[%c0_70, %c0_71, %c0_72] : memref<2x128x32xbf16, #tpu.memory_space<vmem>>, vector<1x128x32xbf16>
    %131 = vector.shape_cast %130 : vector<1x128x32xbf16> to vector<128x32xbf16>
    %132 = arith.truncf %129 : vector<16x128xf32> to vector<16x128xbf16>
    %cst_73 = arith.constant dense<0.000000e+00> : vector<16x32xf32>
    %133 = tpu.matmul %132, %131, %cst_73 {dimension_numbers = #tpu.dot_dimension_numbers<[1], [0], [0], [1], [0, 0, 1, 1], [], []>} : vector<16x128xbf16>, vector<128x32xbf16>, vector<16x32xf32> -> vector<16x32xf32>
    %c0_74 = arith.constant 0 : index
    %c0_75 = arith.constant 0 : index
    %134 = vector.load %arg15[%c0_74, %c0_75] : memref<2x32xf32, #tpu.memory_space<vmem>>, vector<1x32xf32>
    %135 = vector.broadcast %134 : vector<1x32xf32> to vector<16x32xf32>
    %136 = arith.addf %133, %135 : vector<16x32xf32>
    %137 = arith.addf %85, %136 : vector<16x32xf32>
    %c1_76 = arith.constant 1 : index
    %c0_77 = arith.constant 0 : index
    %138 = vector.load %arg4[%c1_76, %c0_77] : memref<2x32xf32, #tpu.memory_space<vmem>>, vector<1x32xf32>
    %c1_78 = arith.constant 1 : index
    %c0_79 = arith.constant 0 : index
    %139 = vector.load %arg5[%c1_78, %c0_79] : memref<2x32xf32, #tpu.memory_space<vmem>>, vector<1x32xf32>
    %cst_80 = arith.constant dense<0.000000e+00> : vector<16xf32>
    %140 = vector.multi_reduction <add>, %137, %cst_80 [1] : vector<16x32xf32> to vector<16xf32>
    %141 = vector.shape_cast %140 : vector<16xf32> to vector<16x1xf32>
    %cst_81 = arith.constant 3.200000e+01 : f32
    %142 = vector.broadcast %cst_81 : f32 to vector<16x1xf32>
    %143 = arith.divf %141, %142 : vector<16x1xf32>
    %144 = vector.broadcast %143 : vector<16x1xf32> to vector<16x32xf32>
    %145 = arith.subf %137, %144 : vector<16x32xf32>
    %146 = arith.mulf %145, %145 : vector<16x32xf32>
    %cst_82 = arith.constant dense<0.000000e+00> : vector<16xf32>
    %147 = vector.multi_reduction <add>, %146, %cst_82 [1] : vector<16x32xf32> to vector<16xf32>
    %148 = vector.shape_cast %147 : vector<16xf32> to vector<16x1xf32>
    %cst_83 = arith.constant 3.200000e+01 : f32
    %149 = vector.broadcast %cst_83 : f32 to vector<16x1xf32>
    %150 = arith.divf %148, %149 : vector<16x1xf32>
    %151 = vector.broadcast %143 : vector<16x1xf32> to vector<16x32xf32>
    %152 = arith.subf %137, %151 : vector<16x32xf32>
    %cst_84 = arith.constant 9.99999974E-6 : f32
    %153 = vector.broadcast %cst_84 : f32 to vector<16x1xf32>
    %154 = arith.addf %150, %153 : vector<16x1xf32>
    %155 = math.rsqrt %154 : vector<16x1xf32>
    %156 = vector.broadcast %155 : vector<16x1xf32> to vector<16x32xf32>
    %157 = arith.mulf %152, %156 : vector<16x32xf32>
    %158 = vector.broadcast %138 : vector<1x32xf32> to vector<16x32xf32>
    %159 = arith.mulf %157, %158 : vector<16x32xf32>
    %160 = vector.broadcast %139 : vector<1x32xf32> to vector<16x32xf32>
    %161 = arith.addf %159, %160 : vector<16x32xf32>
    %c1_85 = arith.constant 1 : index
    %c0_86 = arith.constant 0 : index
    %c0_87 = arith.constant 0 : index
    %c0_88 = arith.constant 0 : index
    %162 = vector.load %arg6[%c1_85, %c0_86, %c0_87, %c0_88] : memref<2x3x32x32xbf16, #tpu.memory_space<vmem>>, vector<1x1x32x32xbf16>
    %163 = vector.shape_cast %162 : vector<1x1x32x32xbf16> to vector<32x32xbf16>
    %164 = arith.truncf %161 : vector<16x32xf32> to vector<16x32xbf16>
    %cst_89 = arith.constant dense<0.000000e+00> : vector<16x32xf32>
    %165 = tpu.matmul %164, %163, %cst_89 {dimension_numbers = #tpu.dot_dimension_numbers<[1], [0], [0], [1], [0, 0, 1, 1], [], []>} : vector<16x32xbf16>, vector<32x32xbf16>, vector<16x32xf32> -> vector<16x32xf32>
    %c1_90 = arith.constant 1 : index
    %c0_91 = arith.constant 0 : index
    %c0_92 = arith.constant 0 : index
    %c0_93 = arith.constant 0 : index
    %166 = vector.load %arg7[%c1_90, %c0_91, %c0_92, %c0_93] : memref<2x3x1x32xf32, #tpu.memory_space<vmem>>, vector<1x1x1x32xf32>
    %167 = vector.shape_cast %166 : vector<1x1x1x32xf32> to vector<1x32xf32>
    %168 = vector.broadcast %167 : vector<1x32xf32> to vector<16x32xf32>
    %169 = arith.addf %165, %168 : vector<16x32xf32>
    %c1_94 = arith.constant 1 : index
    %c1_95 = arith.constant 1 : index
    %c0_96 = arith.constant 0 : index
    %c0_97 = arith.constant 0 : index
    %170 = vector.load %arg6[%c1_94, %c1_95, %c0_96, %c0_97] : memref<2x3x32x32xbf16, #tpu.memory_space<vmem>>, vector<1x1x32x32xbf16>
    %171 = vector.shape_cast %170 : vector<1x1x32x32xbf16> to vector<32x32xbf16>
    %172 = arith.truncf %161 : vector<16x32xf32> to vector<16x32xbf16>
    %cst_98 = arith.constant dense<0.000000e+00> : vector<16x32xf32>
    %173 = tpu.matmul %172, %171, %cst_98 {dimension_numbers = #tpu.dot_dimension_numbers<[1], [0], [0], [1], [0, 0, 1, 1], [], []>} : vector<16x32xbf16>, vector<32x32xbf16>, vector<16x32xf32> -> vector<16x32xf32>
    %c1_99 = arith.constant 1 : index
    %c1_100 = arith.constant 1 : index
    %c0_101 = arith.constant 0 : index
    %c0_102 = arith.constant 0 : index
    %174 = vector.load %arg7[%c1_99, %c1_100, %c0_101, %c0_102] : memref<2x3x1x32xf32, #tpu.memory_space<vmem>>, vector<1x1x1x32xf32>
    %175 = vector.shape_cast %174 : vector<1x1x1x32xf32> to vector<1x32xf32>
    %176 = vector.broadcast %175 : vector<1x32xf32> to vector<16x32xf32>
    %177 = arith.addf %173, %176 : vector<16x32xf32>
    %c1_103 = arith.constant 1 : index
    %c2_104 = arith.constant 2 : index
    %c0_105 = arith.constant 0 : index
    %c0_106 = arith.constant 0 : index
    %178 = vector.load %arg6[%c1_103, %c2_104, %c0_105, %c0_106] : memref<2x3x32x32xbf16, #tpu.memory_space<vmem>>, vector<1x1x32x32xbf16>
    %179 = vector.shape_cast %178 : vector<1x1x32x32xbf16> to vector<32x32xbf16>
    %180 = arith.truncf %161 : vector<16x32xf32> to vector<16x32xbf16>
    %cst_107 = arith.constant dense<0.000000e+00> : vector<16x32xf32>
    %181 = tpu.matmul %180, %179, %cst_107 {dimension_numbers = #tpu.dot_dimension_numbers<[1], [0], [0], [1], [0, 0, 1, 1], [], []>} : vector<16x32xbf16>, vector<32x32xbf16>, vector<16x32xf32> -> vector<16x32xf32>
    %c1_108 = arith.constant 1 : index
    %c2_109 = arith.constant 2 : index
    %c0_110 = arith.constant 0 : index
    %c0_111 = arith.constant 0 : index
    %182 = vector.load %arg7[%c1_108, %c2_109, %c0_110, %c0_111] : memref<2x3x1x32xf32, #tpu.memory_space<vmem>>, vector<1x1x1x32xf32>
    %183 = vector.shape_cast %182 : vector<1x1x1x32xf32> to vector<1x32xf32>
    %184 = vector.broadcast %183 : vector<1x32xf32> to vector<16x32xf32>
    %185 = arith.addf %181, %184 : vector<16x32xf32>
    %186 = vector.shape_cast %169 : vector<16x32xf32> to vector<2x8x32xf32>
    %187 = vector.shape_cast %177 : vector<16x32xf32> to vector<2x8x32xf32>
    %188 = vector.shape_cast %185 : vector<16x32xf32> to vector<2x8x32xf32>
    %189 = arith.truncf %186 : vector<2x8x32xf32> to vector<2x8x32xbf16>
    %190 = arith.truncf %187 : vector<2x8x32xf32> to vector<2x8x32xbf16>
    %cst_112 = arith.constant dense<0.000000e+00> : vector<2x8x8xf32>
    %191 = tpu.matmul %189, %190, %cst_112 {dimension_numbers = #tpu.dot_dimension_numbers<[2], [2], [1], [1], [0, 0, 0, 1, 1, 1], [0], [0]>} : vector<2x8x32xbf16>, vector<2x8x32xbf16>, vector<2x8x8xf32> -> vector<2x8x8xf32>
    %cst_113 = arith.constant 0.176776692 : f32
    %192 = vector.broadcast %cst_113 : f32 to vector<2x8x8xf32>
    %193 = arith.mulf %191, %192 : vector<2x8x8xf32>
    %cst_114 = arith.constant dense<0xFF800000> : vector<2x8xf32>
    %194 = vector.multi_reduction <maximumf>, %193, %cst_114 [2] : vector<2x8x8xf32> to vector<2x8xf32>
    %195 = vector.shape_cast %194 : vector<2x8xf32> to vector<2x8x1xf32>
    %196 = vector.broadcast %195 : vector<2x8x1xf32> to vector<2x8x8xf32>
    %197 = arith.subf %193, %196 : vector<2x8x8xf32>
    %198 = math.exp %197 : vector<2x8x8xf32>
    %cst_115 = arith.constant dense<0.000000e+00> : vector<2x8xf32>
    %199 = vector.multi_reduction <add>, %198, %cst_115 [2] : vector<2x8x8xf32> to vector<2x8xf32>
    %200 = vector.shape_cast %199 : vector<2x8xf32> to vector<2x8x1xf32>
    %201 = tpu.reciprocal %200 {approx = true} : vector<2x8x1xf32> -> vector<2x8x1xf32>
    %202 = vector.broadcast %201 : vector<2x8x1xf32> to vector<2x8x8xf32>
    %203 = arith.mulf %198, %202 : vector<2x8x8xf32>
    %204 = arith.truncf %203 : vector<2x8x8xf32> to vector<2x8x8xbf16>
    %205 = arith.truncf %188 : vector<2x8x32xf32> to vector<2x8x32xbf16>
    %cst_116 = arith.constant dense<0.000000e+00> : vector<2x8x32xf32>
    %206 = tpu.matmul %204, %205, %cst_116 {dimension_numbers = #tpu.dot_dimension_numbers<[2], [1], [1], [2], [0, 0, 0, 1, 1, 2], [0], [0]>} : vector<2x8x8xbf16>, vector<2x8x32xbf16>, vector<2x8x32xf32> -> vector<2x8x32xf32>
    %207 = vector.shape_cast %206 : vector<2x8x32xf32> to vector<16x32xf32>
    %c1_117 = arith.constant 1 : index
    %c0_118 = arith.constant 0 : index
    %c0_119 = arith.constant 0 : index
    %208 = vector.load %arg8[%c1_117, %c0_118, %c0_119] : memref<2x32x32xbf16, #tpu.memory_space<vmem>>, vector<1x32x32xbf16>
    %209 = vector.shape_cast %208 : vector<1x32x32xbf16> to vector<32x32xbf16>
    %210 = arith.truncf %207 : vector<16x32xf32> to vector<16x32xbf16>
    %cst_120 = arith.constant dense<0.000000e+00> : vector<16x32xf32>
    %211 = tpu.matmul %210, %209, %cst_120 {dimension_numbers = #tpu.dot_dimension_numbers<[1], [0], [0], [1], [0, 0, 1, 1], [], []>} : vector<16x32xbf16>, vector<32x32xbf16>, vector<16x32xf32> -> vector<16x32xf32>
    %c1_121 = arith.constant 1 : index
    %c0_122 = arith.constant 0 : index
    %212 = vector.load %arg9[%c1_121, %c0_122] : memref<2x32xf32, #tpu.memory_space<vmem>>, vector<1x32xf32>
    %213 = vector.broadcast %212 : vector<1x32xf32> to vector<16x32xf32>
    %214 = arith.addf %211, %213 : vector<16x32xf32>
    %215 = arith.addf %137, %214 : vector<16x32xf32>
    %c1_123 = arith.constant 1 : index
    %c0_124 = arith.constant 0 : index
    %216 = vector.load %arg10[%c1_123, %c0_124] : memref<2x32xf32, #tpu.memory_space<vmem>>, vector<1x32xf32>
    %c1_125 = arith.constant 1 : index
    %c0_126 = arith.constant 0 : index
    %217 = vector.load %arg11[%c1_125, %c0_126] : memref<2x32xf32, #tpu.memory_space<vmem>>, vector<1x32xf32>
    %cst_127 = arith.constant dense<0.000000e+00> : vector<16xf32>
    %218 = vector.multi_reduction <add>, %215, %cst_127 [1] : vector<16x32xf32> to vector<16xf32>
    %219 = vector.shape_cast %218 : vector<16xf32> to vector<16x1xf32>
    %cst_128 = arith.constant 3.200000e+01 : f32
    %220 = vector.broadcast %cst_128 : f32 to vector<16x1xf32>
    %221 = arith.divf %219, %220 : vector<16x1xf32>
    %222 = vector.broadcast %221 : vector<16x1xf32> to vector<16x32xf32>
    %223 = arith.subf %215, %222 : vector<16x32xf32>
    %224 = arith.mulf %223, %223 : vector<16x32xf32>
    %cst_129 = arith.constant dense<0.000000e+00> : vector<16xf32>
    %225 = vector.multi_reduction <add>, %224, %cst_129 [1] : vector<16x32xf32> to vector<16xf32>
    %226 = vector.shape_cast %225 : vector<16xf32> to vector<16x1xf32>
    %cst_130 = arith.constant 3.200000e+01 : f32
    %227 = vector.broadcast %cst_130 : f32 to vector<16x1xf32>
    %228 = arith.divf %226, %227 : vector<16x1xf32>
    %229 = vector.broadcast %221 : vector<16x1xf32> to vector<16x32xf32>
    %230 = arith.subf %215, %229 : vector<16x32xf32>
    %cst_131 = arith.constant 9.99999974E-6 : f32
    %231 = vector.broadcast %cst_131 : f32 to vector<16x1xf32>
    %232 = arith.addf %228, %231 : vector<16x1xf32>
    %233 = math.rsqrt %232 : vector<16x1xf32>
    %234 = vector.broadcast %233 : vector<16x1xf32> to vector<16x32xf32>
    %235 = arith.mulf %230, %234 : vector<16x32xf32>
    %236 = vector.broadcast %216 : vector<1x32xf32> to vector<16x32xf32>
    %237 = arith.mulf %235, %236 : vector<16x32xf32>
    %238 = vector.broadcast %217 : vector<1x32xf32> to vector<16x32xf32>
    %239 = arith.addf %237, %238 : vector<16x32xf32>
    %c1_132 = arith.constant 1 : index
    %c0_133 = arith.constant 0 : index
    %c0_134 = arith.constant 0 : index
    %240 = vector.load %arg12[%c1_132, %c0_133, %c0_134] : memref<2x32x128xbf16, #tpu.memory_space<vmem>>, vector<1x32x128xbf16>
    %241 = vector.shape_cast %240 : vector<1x32x128xbf16> to vector<32x128xbf16>
    %242 = arith.truncf %239 : vector<16x32xf32> to vector<16x32xbf16>
    %cst_135 = arith.constant dense<0.000000e+00> : vector<16x128xf32>
    %243 = tpu.matmul %242, %241, %cst_135 {dimension_numbers = #tpu.dot_dimension_numbers<[1], [0], [0], [1], [0, 0, 1, 1], [], []>} : vector<16x32xbf16>, vector<32x128xbf16>, vector<16x128xf32> -> vector<16x128xf32>
    %c1_136 = arith.constant 1 : index
    %c0_137 = arith.constant 0 : index
    %244 = vector.load %arg13[%c1_136, %c0_137] : memref<2x128xf32, #tpu.memory_space<vmem>>, vector<1x128xf32>
    %245 = vector.broadcast %244 : vector<1x128xf32> to vector<16x128xf32>
    %246 = arith.addf %243, %245 : vector<16x128xf32>
    %cst_138 = arith.constant 5.000000e-01 : f32
    %247 = vector.broadcast %cst_138 : f32 to vector<16x128xf32>
    %248 = arith.mulf %247, %246 : vector<16x128xf32>
    %249 = arith.mulf %246, %246 : vector<16x128xf32>
    %250 = arith.mulf %246, %249 : vector<16x128xf32>
    %cst_139 = arith.constant 4.471500e-02 : f32
    %251 = vector.broadcast %cst_139 : f32 to vector<16x128xf32>
    %252 = arith.mulf %251, %250 : vector<16x128xf32>
    %253 = arith.addf %246, %252 : vector<16x128xf32>
    %cst_140 = arith.constant 0.797884583 : f32
    %254 = vector.broadcast %cst_140 : f32 to vector<16x128xf32>
    %255 = arith.mulf %254, %253 : vector<16x128xf32>
    %256 = math.tanh %255 : vector<16x128xf32>
    %cst_141 = arith.constant 1.000000e+00 : f32
    %257 = vector.broadcast %cst_141 : f32 to vector<16x128xf32>
    %258 = arith.addf %257, %256 : vector<16x128xf32>
    %259 = arith.mulf %248, %258 : vector<16x128xf32>
    %c1_142 = arith.constant 1 : index
    %c0_143 = arith.constant 0 : index
    %c0_144 = arith.constant 0 : index
    %260 = vector.load %arg14[%c1_142, %c0_143, %c0_144] : memref<2x128x32xbf16, #tpu.memory_space<vmem>>, vector<1x128x32xbf16>
    %261 = vector.shape_cast %260 : vector<1x128x32xbf16> to vector<128x32xbf16>
    %262 = arith.truncf %259 : vector<16x128xf32> to vector<16x128xbf16>
    %cst_145 = arith.constant dense<0.000000e+00> : vector<16x32xf32>
    %263 = tpu.matmul %262, %261, %cst_145 {dimension_numbers = #tpu.dot_dimension_numbers<[1], [0], [0], [1], [0, 0, 1, 1], [], []>} : vector<16x128xbf16>, vector<128x32xbf16>, vector<16x32xf32> -> vector<16x32xf32>
    %c1_146 = arith.constant 1 : index
    %c0_147 = arith.constant 0 : index
    %264 = vector.load %arg15[%c1_146, %c0_147] : memref<2x32xf32, #tpu.memory_space<vmem>>, vector<1x32xf32>
    %265 = vector.broadcast %264 : vector<1x32xf32> to vector<16x32xf32>
    %266 = arith.addf %263, %265 : vector<16x32xf32>
    %267 = arith.addf %215, %266 : vector<16x32xf32>
    %c0_148 = arith.constant 0 : index
    %c0_149 = arith.constant 0 : index
    %268 = vector.load %arg16[%c0_148, %c0_149] : memref<1x32xf32, #tpu.memory_space<vmem>>, vector<1x32xf32>
    %c0_150 = arith.constant 0 : index
    %c0_151 = arith.constant 0 : index
    %269 = vector.load %arg17[%c0_150, %c0_151] : memref<1x32xf32, #tpu.memory_space<vmem>>, vector<1x32xf32>
    %cst_152 = arith.constant dense<0.000000e+00> : vector<16xf32>
    %270 = vector.multi_reduction <add>, %267, %cst_152 [1] : vector<16x32xf32> to vector<16xf32>
    %271 = vector.shape_cast %270 : vector<16xf32> to vector<16x1xf32>
    %cst_153 = arith.constant 3.200000e+01 : f32
    %272 = vector.broadcast %cst_153 : f32 to vector<16x1xf32>
    %273 = arith.divf %271, %272 : vector<16x1xf32>
    %274 = vector.broadcast %273 : vector<16x1xf32> to vector<16x32xf32>
    %275 = arith.subf %267, %274 : vector<16x32xf32>
    %276 = arith.mulf %275, %275 : vector<16x32xf32>
    %cst_154 = arith.constant dense<0.000000e+00> : vector<16xf32>
    %277 = vector.multi_reduction <add>, %276, %cst_154 [1] : vector<16x32xf32> to vector<16xf32>
    %278 = vector.shape_cast %277 : vector<16xf32> to vector<16x1xf32>
    %cst_155 = arith.constant 3.200000e+01 : f32
    %279 = vector.broadcast %cst_155 : f32 to vector<16x1xf32>
    %280 = arith.divf %278, %279 : vector<16x1xf32>
    %281 = vector.broadcast %273 : vector<16x1xf32> to vector<16x32xf32>
    %282 = arith.subf %267, %281 : vector<16x32xf32>
    %cst_156 = arith.constant 9.99999974E-6 : f32
    %283 = vector.broadcast %cst_156 : f32 to vector<16x1xf32>
    %284 = arith.addf %280, %283 : vector<16x1xf32>
    %285 = math.rsqrt %284 : vector<16x1xf32>
    %286 = vector.broadcast %285 : vector<16x1xf32> to vector<16x32xf32>
    %287 = arith.mulf %282, %286 : vector<16x32xf32>
    %288 = vector.broadcast %268 : vector<1x32xf32> to vector<16x32xf32>
    %289 = arith.mulf %287, %288 : vector<16x32xf32>
    %290 = vector.broadcast %269 : vector<1x32xf32> to vector<16x32xf32>
    %291 = arith.addf %289, %290 : vector<16x32xf32>
    %292 = vector.shape_cast %291 : vector<16x32xf32> to vector<2x8x32xf32>
    %cst_157 = arith.constant dense<0xFF800000> : vector<2x32xf32>
    %293 = vector.multi_reduction <maximumf>, %292, %cst_157 [1] : vector<2x8x32xf32> to vector<2x32xf32>
    %c0_158 = arith.constant 0 : index
    %c0_159 = arith.constant 0 : index
    %294 = vector.load %arg18[%c0_158, %c0_159] : memref<32x128xbf16, #tpu.memory_space<vmem>>, vector<32x128xbf16>
    %295 = arith.truncf %293 : vector<2x32xf32> to vector<2x32xbf16>
    %cst_160 = arith.constant dense<0.000000e+00> : vector<2x128xf32>
    %296 = tpu.matmul %295, %294, %cst_160 {dimension_numbers = #tpu.dot_dimension_numbers<[1], [0], [0], [1], [0, 0, 1, 1], [], []>} : vector<2x32xbf16>, vector<32x128xbf16>, vector<2x128xf32> -> vector<2x128xf32>
    %297 = tpu.iota {dimensions = array<i32: 1>} : vector<2x128xi32>
    %c4_i32 = arith.constant 4 : i32
    %298 = vector.broadcast %c4_i32 : i32 to vector<2x128xi32>
    %299 = arith.cmpi slt, %297, %298 : vector<2x128xi32>
    %cst_161 = arith.constant 0.000000e+00 : f32
    %300 = vector.broadcast %cst_161 : f32 to vector<2x128xf32>
    %301 = arith.select %299, %300, %296 : vector<2x128xi1>, vector<2x128xf32>
    %cst_162 = arith.constant 5.000000e-01 : f32
    %302 = vector.broadcast %cst_162 : f32 to vector<2x128xf32>
    %303 = arith.mulf %302, %301 : vector<2x128xf32>
    %304 = math.exp %303 : vector<2x128xf32>
    %305 = arith.select %299, %296, %304 : vector<2x128xi1>, vector<2x128xf32>
    %c0_163 = arith.constant 0 : index
    %c0_164 = arith.constant 0 : index
    %c0_165 = arith.constant 0 : index
    %306 = vector.load %arg19[%c0_163, %c0_164, %c0_165] : memref<1x2x128xf32, #tpu.memory_space<vmem>>, vector<1x2x128xf32>
    %307 = vector.shape_cast %306 : vector<1x2x128xf32> to vector<2x128xf32>
    %308 = vector.shape_cast %305 : vector<2x128xf32> to vector<1x2x128xf32>
    tpu.vector_store %arg19[%c0_163, %c0_164, %c0_165], %308 {strides = array<i32>} : memref<1x2x128xf32, #tpu.memory_space<vmem>>, vector<1x2x128xf32>,
    return
  }
  func.func @transform_0(%arg0: i32) -> (i32, i32, i32) {
    %c0_i32 = arith.constant 0 : i32
    %c0_i32_0 = arith.constant 0 : i32
    %c0_i32_1 = arith.constant 0 : i32
    return %arg0, %c0_i32, %c0_i32_0 : i32, i32, i32
  }
  func.func @transform_1(%arg0: i32) -> (i32, i32) {
    %c0_i32 = arith.constant 0 : i32
    %c0_i32_0 = arith.constant 0 : i32
    %c0_i32_1 = arith.constant 0 : i32
    return %c0_i32, %c0_i32_0 : i32, i32
  }
  func.func @transform_2(%arg0: i32) -> (i32, i32) {
    %c0_i32 = arith.constant 0 : i32
    %c0_i32_0 = arith.constant 0 : i32
    %c0_i32_1 = arith.constant 0 : i32
    return %c0_i32, %c0_i32_0 : i32, i32
  }
  func.func @transform_3(%arg0: i32) -> (i32, i32) {
    %c0_i32 = arith.constant 0 : i32
    %c0_i32_0 = arith.constant 0 : i32
    %c0_i32_1 = arith.constant 0 : i32
    return %c0_i32, %c0_i32_0 : i32, i32
  }
  func.func @transform_4(%arg0: i32) -> (i32, i32) {
    %c0_i32 = arith.constant 0 : i32
    %c0_i32_0 = arith.constant 0 : i32
    %c0_i32_1 = arith.constant 0 : i32
    return %c0_i32, %c0_i32_0 : i32, i32
  }
  func.func @transform_5(%arg0: i32) -> (i32, i32, i32, i32) {
    %c0_i32 = arith.constant 0 : i32
    %c0_i32_0 = arith.constant 0 : i32
    %c0_i32_1 = arith.constant 0 : i32
    %c0_i32_2 = arith.constant 0 : i32
    %c0_i32_3 = arith.constant 0 : i32
    return %c0_i32, %c0_i32_0, %c0_i32_1, %c0_i32_2 : i32, i32, i32, i32
  }
  func.func @transform_6(%arg0: i32) -> (i32, i32, i32, i32) {
    %c0_i32 = arith.constant 0 : i32
    %c0_i32_0 = arith.constant 0 : i32
    %c0_i32_1 = arith.constant 0 : i32
    %c0_i32_2 = arith.constant 0 : i32
    %c0_i32_3 = arith.constant 0 : i32
    return %c0_i32, %c0_i32_0, %c0_i32_1, %c0_i32_2 : i32, i32, i32, i32
  }
  func.func @transform_7(%arg0: i32) -> (i32, i32, i32) {
    %c0_i32 = arith.constant 0 : i32
    %c0_i32_0 = arith.constant 0 : i32
    %c0_i32_1 = arith.constant 0 : i32
    %c0_i32_2 = arith.constant 0 : i32
    return %c0_i32, %c0_i32_0, %c0_i32_1 : i32, i32, i32
  }
  func.func @transform_8(%arg0: i32) -> (i32, i32) {
    %c0_i32 = arith.constant 0 : i32
    %c0_i32_0 = arith.constant 0 : i32
    %c0_i32_1 = arith.constant 0 : i32
    return %c0_i32, %c0_i32_0 : i32, i32
  }
  func.func @transform_9(%arg0: i32) -> (i32, i32) {
    %c0_i32 = arith.constant 0 : i32
    %c0_i32_0 = arith.constant 0 : i32
    %c0_i32_1 = arith.constant 0 : i32
    return %c0_i32, %c0_i32_0 : i32, i32
  }
  func.func @transform_10(%arg0: i32) -> (i32, i32) {
    %c0_i32 = arith.constant 0 : i32
    %c0_i32_0 = arith.constant 0 : i32
    %c0_i32_1 = arith.constant 0 : i32
    return %c0_i32, %c0_i32_0 : i32, i32
  }
  func.func @transform_11(%arg0: i32) -> (i32, i32, i32) {
    %c0_i32 = arith.constant 0 : i32
    %c0_i32_0 = arith.constant 0 : i32
    %c0_i32_1 = arith.constant 0 : i32
    %c0_i32_2 = arith.constant 0 : i32
    return %c0_i32, %c0_i32_0, %c0_i32_1 : i32, i32, i32
  }
  func.func @transform_12(%arg0: i32) -> (i32, i32) {
    %c0_i32 = arith.constant 0 : i32
    %c0_i32_0 = arith.constant 0 : i32
    %c0_i32_1 = arith.constant 0 : i32
    return %c0_i32, %c0_i32_0 : i32, i32
  }
  func.func @transform_13(%arg0: i32) -> (i32, i32, i32) {
    %c0_i32 = arith.constant 0 : i32
    %c0_i32_0 = arith.constant 0 : i32
    %c0_i32_1 = arith.constant 0 : i32
    %c0_i32_2 = arith.constant 0 : i32
    return %c0_i32, %c0_i32_0, %c0_i32_1 : i32, i32, i32
  }
  func.func @transform_14(%arg0: i32) -> (i32, i32) {
    %c0_i32 = arith.constant 0 : i32
    %c0_i32_0 = arith.constant 0 : i32
    %c0_i32_1 = arith.constant 0 : i32
    return %c0_i32, %c0_i32_0 : i32, i32
  }
  func.func @transform_15(%arg0: i32) -> (i32, i32) {
    %c0_i32 = arith.constant 0 : i32
    %c0_i32_0 = arith.constant 0 : i32
    %c0_i32_1 = arith.constant 0 : i32
    return %c0_i32, %c0_i32_0 : i32, i32
  }
  func.func @transform_16(%arg0: i32) -> (i32, i32) {
    %c0_i32 = arith.constant 0 : i32
    %c0_i32_0 = arith.constant 0 : i32
    %c0_i32_1 = arith.constant 0 : i32
    return %c0_i32, %c0_i32_0 : i32, i32
  }
  func.func @transform_17(%arg0: i32) -> (i32, i32) {
    %c0_i32 = arith.constant 0 : i32
    %c0_i32_0 = arith.constant 0 : i32
    %c0_i32_1 = arith.constant 0 : i32
    return %c0_i32, %c0_i32_0 : i32, i32
  }
  func.func @transform_18(%arg0: i32) -> (i32, i32, i32) {
    %c0_i32 = arith.constant 0 : i32
    %c0_i32_0 = arith.constant 0 : i32
    %c0_i32_1 = arith.constant 0 : i32
    return %arg0, %c0_i32, %c0_i32_0 : i32, i32, i32
  }
}

</mosaic_0001>

<llo_original>
// kernel: tpu_custom_call.1
$region0: #{tpu_custom_call.1}
  #allocation0 [shape = 'u32[]', space=smem, size = 0x4, offset = 0x4, fixed_abs, tag = 'smem constant byte address 0x4 - core index']
  #allocation1 [shape = 'u32[144,128]{1,0:T(1,128)}', space=vmem, size = 0x12000, scoped, tag = 'internal scratch']
  %s0 = inlined_call_operand.vmem [shape: f32[1,16,8], index: 0, kind: input, shape index: {}]
  %s1 = inlined_call_operand.hbm [shape: bf16[8,32], index: 1, kind: input, shape index: {}]
  %s2 = inlined_call_operand.vmem [shape: f32[1,32], index: 2, kind: input, shape index: {}]
  %s3 = inlined_call_operand.hbm [shape: f32[2,32], index: 3, kind: input, shape index: {}]
  %s4 = inlined_call_operand.hbm [shape: f32[2,32], index: 4, kind: input, shape index: {}]
  %s5 = inlined_call_operand.vmem [shape: bf16[2,3,32,32], index: 5, kind: input, shape index: {}]
  %s6 = inlined_call_operand.hbm [shape: f32[2,3,1,32], index: 6, kind: input, shape index: {}]
  %s7 = inlined_call_operand.vmem [shape: bf16[2,32,32], index: 7, kind: input, shape index: {}]
  %s8 = inlined_call_operand.hbm [shape: f32[2,32], index: 8, kind: input, shape index: {}]
  %s9 = inlined_call_operand.hbm [shape: f32[2,32], index: 9, kind: input, shape index: {}]
  %s10 = inlined_call_operand.hbm [shape: f32[2,32], index: 10, kind: input, shape index: {}]
  %s11 = inlined_call_operand.vmem [shape: bf16[2,32,128], index: 11, kind: input, shape index: {}]
  %s12 = inlined_call_operand.hbm [shape: f32[2,128], index: 12, kind: input, shape index: {}]
  %s13 = inlined_call_operand.vmem [shape: bf16[2,128,32], index: 13, kind: input, shape index: {}]
  %s14 = inlined_call_operand.hbm [shape: f32[2,32], index: 14, kind: input, shape index: {}]
  %s15 = inlined_call_operand.hbm [shape: f32[1,32], index: 15, kind: input, shape index: {}]
  %s16 = inlined_call_operand.vmem [shape: f32[1,32], index: 16, kind: input, shape index: {}]
  %s17 = inlined_call_operand.vmem [shape: bf16[32,128], index: 17, kind: input, shape index: {}]
  %s18 = inlined_call_operand.hbm [shape: f32[1,2,128], index: 18, kind: output, shape index: {}]
  %s19 = sld [smem:[#allocation0]]
  $region122: #{tpu_custom_call.1} parent=0
    _
  %s21 = ssub.s32 1, %s19
  %s22 = scalar_select 0, %s21, %s19
  $region1: #{tpu_custom_call.1} parent=0
    #allocation2 [shape = 'u8[2048]{0}', space=vmem, size = 0x800, scoped, tag = 'input window, operand 1, single buffered']
    #allocation3 [shape = 's32[1]{0}', space=sflag, size = 0x4, scoped, tag = 'scoped memory for tpu_custom_call.1']
    #allocation4 [shape = 's32[1]{0}', space=sflag, size = 0x4, scoped, tag = 'scoped memory for tpu_custom_call.1']
    #allocation5 [shape = 'u8[1024]{0}', space=vmem, size = 0x400, scoped, tag = 'input window, operand 3, single buffered']
    #allocation6 [shape = 's32[1]{0}', space=sflag, size = 0x4, scoped, tag = 'scoped memory for tpu_custom_call.1']
    #allocation7 [shape = 'u8[1024]{0}', space=vmem, size = 0x400, scoped, tag = 'input window, operand 4, single buffered']
    #allocation8 [shape = 'u8[3072]{0}', space=vmem, size = 0xc00, scoped, tag = 'input window, operand 6, single buffered']
    #allocation9 [shape = 's32[1]{0}', space=sflag, size = 0x4, scoped, tag = 'scoped memory for tpu_custom_call.1']
    #allocation10 [shape = 'u8[1024]{0}', space=vmem, size = 0x400, scoped, tag = 'input window, operand 8, single buffered']
    #allocation11 [shape = 'u8[1024]{0}', space=vmem, size = 0x400, scoped, tag = 'input window, operand 9, single buffered']
    #allocation12 [shape = 's32[1]{0}', space=sflag, size = 0x4, scoped, tag = 'scoped memory for tpu_custom_call.1']
    #allocation13 [shape = 'u8[1024]{0}', space=vmem, size = 0x400, scoped, tag = 'input window, operand 10, single buffered']
    #allocation14 [shape = 'u8[1024]{0}', space=vmem, size = 0x400, scoped, tag = 'input window, operand 12, single buffered']
    #allocation15 [shape = 's32[1]{0}', space=sflag, size = 0x4, scoped, tag = 'scoped memory for tpu_custom_call.1']
    #allocation16 [shape = 'u8[1024]{0}', space=vmem, size = 0x400, scoped, tag = 'input window, operand 14, single buffered']
    #allocation17 [shape = 'u8[512]{0}', space=vmem, size = 0x400, scoped, tag = 'input window, operand 15, single buffered']
    #allocation18 [shape = 's32[1]{0}', space=sflag, size = 0x4, scoped, tag = 'scoped memory for tpu_custom_call.1']
    #allocation19 [shape = 'u8[1024]{0}', space=vmem, size = 0x400, scoped, tag = 'output window, operand 0, single buffered']
    %23 = vsyncpa [#allocation3], 0
    %24 = vsyncpa [#allocation6], 0
    %25 = vsyncpa [#allocation9], 0
    %26 = vsyncpa [#allocation12], 0
    %27 = vsyncpa [#allocation15], 0
    %28 = vsyncpa [#allocation18], 0
    %29 = vsyncpa [#allocation4], 0
    // Predicated region
    $region2: #{tpu_custom_call.1} parent=1 // pred_check
      _
    $region3: #{tpu_custom_call.1} parent=1 // pred_check_branch
      %31 = sbr.rel (0) target = $region5
    $region4: #{tpu_custom_call.1} parent=1 // pred_region
      _
    $region5: #{tpu_custom_call.1} parent=1 // pred_fallthru
      _
    // Predicated region
    $region6: #{tpu_custom_call.1} parent=1 // pred_check
      _
    $region7: #{tpu_custom_call.1} parent=1 // pred_check_branch
      %33 = sbr.rel (0) target = $region9
    $region8: #{tpu_custom_call.1} parent=1 // pred_region
      %s35 = ssub.s32 64, 64
      %36 = vsyncadd [#allocation3], %s35
      %s38 = sshll.u32 [#allocation2], 4
      %s39 = int_to_ptr.vmem [resolvable:$true] %s38
      %41 = dma.hbm_to_vmem [thread:$0]  %s1, 64, %s39, [#allocation3]
    $region9: #{tpu_custom_call.1} parent=1 // pred_fallthru
      _
    // Predicated region
    $region10: #{tpu_custom_call.1} parent=1 // pred_check
      _
    $region11: #{tpu_custom_call.1} parent=1 // pred_check_branch
      %43 = sbr.rel (0) target = $region13
    $region12: #{tpu_custom_call.1} parent=1 // pred_region
      _
    $region13: #{tpu_custom_call.1} parent=1 // pred_fallthru
      _
    // Predicated region
    $region14: #{tpu_custom_call.1} parent=1 // pred_check
      _
    $region15: #{tpu_custom_call.1} parent=1 // pred_check_branch
      %45 = sbr.rel (0) target = $region17
    $region16: #{tpu_custom_call.1} parent=1 // pred_region
      %s47 = ssub.s32 32, 32
      %48 = vsyncadd [#allocation6], %s47
      %s50 = sshll.u32 [#allocation5], 4
      %s51 = int_to_ptr.vmem [resolvable:$true] %s50
      %53 = dma.hbm_to_vmem [thread:$0]  %s3, 32, %s51, [#allocation6]
    $region17: #{tpu_custom_call.1} parent=1 // pred_fallthru
      _
    // Predicated region
    $region18: #{tpu_custom_call.1} parent=1 // pred_check
      _
    $region19: #{tpu_custom_call.1} parent=1 // pred_check_branch
      %55 = sbr.rel (0) target = $region21
    $region20: #{tpu_custom_call.1} parent=1 // pred_region
      %s57 = ssub.s32 32, 32
      %58 = vsyncadd [#allocation6], %s57
      %s60 = sshll.u32 [#allocation7], 4
      %s61 = int_to_ptr.vmem [resolvable:$true] %s60
      %63 = dma.hbm_to_vmem [thread:$0]  %s4, 32, %s61, [#allocation6]
    $region21: #{tpu_custom_call.1} parent=1 // pred_fallthru
      _
    // Predicated region
    $region22: #{tpu_custom_call.1} parent=1 // pred_check
      _
    $region23: #{tpu_custom_call.1} parent=1 // pred_check_branch
      %65 = sbr.rel (0) target = $region25
    $region24: #{tpu_custom_call.1} parent=1 // pred_region
      _
    $region25: #{tpu_custom_call.1} parent=1 // pred_fallthru
      _
    // Predicated region
    $region26: #{tpu_custom_call.1} parent=1 // pred_check
      _
    $region27: #{tpu_custom_call.1} parent=1 // pred_check_branch
      %67 = sbr.rel (0) target = $region29
    $region28: #{tpu_custom_call.1} parent=1 // pred_region
      %s69 = ssub.s32 96, 96
      %70 = vsyncadd [#allocation9], %s69
      %s71 = sshll.u32 [#allocation8], 4
      %s72 = int_to_ptr.vmem [resolvable:$true] %s71
      %77 = dma.hbm_to_vmem [thread:$0]  %s6, 96, %s72, [#allocation9], 16, 16, 1
    $region29: #{tpu_custom_call.1} parent=1 // pred_fallthru
      _
    // Predicated region
    $region30: #{tpu_custom_call.1} parent=1 // pred_check
      _
    $region31: #{tpu_custom_call.1} parent=1 // pred_check_branch
      %79 = sbr.rel (0) target = $region33
    $region32: #{tpu_custom_call.1} parent=1 // pred_region
      _
    $region33: #{tpu_custom_call.1} parent=1 // pred_fallthru
      _
    // Predicated region
    $region34: #{tpu_custom_call.1} parent=1 // pred_check
      _
    $region35: #{tpu_custom_call.1} parent=1 // pred_check_branch
      %81 = sbr.rel (0) target = $region37
    $region36: #{tpu_custom_call.1} parent=1 // pred_region
      %s83 = ssub.s32 32, 32
      %84 = vsyncadd [#allocation9], %s83
      %s86 = sshll.u32 [#allocation10], 4
      %s87 = int_to_ptr.vmem [resolvable:$true] %s86
      %89 = dma.hbm_to_vmem [thread:$0]  %s8, 32, %s87, [#allocation9]
    $region37: #{tpu_custom_call.1} parent=1 // pred_fallthru
      _
    // Predicated region
    $region38: #{tpu_custom_call.1} parent=1 // pred_check
      _
    $region39: #{tpu_custom_call.1} parent=1 // pred_check_branch
      %91 = sbr.rel (0) target = $region41
    $region40: #{tpu_custom_call.1} parent=1 // pred_region
      %s93 = ssub.s32 32, 32
      %94 = vsyncadd [#allocation12], %s93
      %s96 = sshll.u32 [#allocation11], 4
      %s97 = int_to_ptr.vmem [resolvable:$true] %s96
      %99 = dma.hbm_to_vmem [thread:$0]  %s9, 32, %s97, [#allocation12]
    $region41: #{tpu_custom_call.1} parent=1 // pred_fallthru
      _
    // Predicated region
    $region42: #{tpu_custom_call.1} parent=1 // pred_check
      _
    $region43: #{tpu_custom_call.1} parent=1 // pred_check_branch
      %101 = sbr.rel (0) target = $region45
    $region44: #{tpu_custom_call.1} parent=1 // pred_region
      %s103 = ssub.s32 32, 32
      %104 = vsyncadd [#allocation12], %s103
      %s106 = sshll.u32 [#allocation13], 4
      %s107 = int_to_ptr.vmem [resolvable:$true] %s106
      %109 = dma.hbm_to_vmem [thread:$0]  %s10, 32, %s107, [#allocation12]
    $region45: #{tpu_custom_call.1} parent=1 // pred_fallthru
      _
    // Predicated region
    $region46: #{tpu_custom_call.1} parent=1 // pred_check
      _
    $region47: #{tpu_custom_call.1} parent=1 // pred_check_branch
      %111 = sbr.rel (0) target = $region49
    $region48: #{tpu_custom_call.1} parent=1 // pred_region
      _
    $region49: #{tpu_custom_call.1} parent=1 // pred_fallthru
      _
    // Predicated region
    $region50: #{tpu_custom_call.1} parent=1 // pred_check
      _
    $region51: #{tpu_custom_call.1} parent=1 // pred_check_branch
      %113 = sbr.rel (0) target = $region53
    $region52: #{tpu_custom_call.1} parent=1 // pred_region
      %s115 = ssub.s32 32, 32
      %116 = vsyncadd [#allocation15], %s115
      %s118 = sshll.u32 [#allocation14], 4
      %s119 = int_to_ptr.vmem [resolvable:$true] %s118
      %121 = dma.hbm_to_vmem [thread:$0]  %s12, 32, %s119, [#allocation15]
    $region53: #{tpu_custom_call.1} parent=1 // pred_fallthru
      _
    // Predicated region
    $region54: #{tpu_custom_call.1} parent=1 // pred_check
      _
    $region55: #{tpu_custom_call.1} parent=1 // pred_check_branch
      %123 = sbr.rel (0) target = $region57
    $region56: #{tpu_custom_call.1} parent=1 // pred_region
      _
    $region57: #{tpu_custom_call.1} parent=1 // pred_fallthru
      _
    // Predicated region
    $region58: #{tpu_custom_call.1} parent=1 // pred_check
      _
    $region59: #{tpu_custom_call.1} parent=1 // pred_check_branch
      %125 = sbr.rel (0) target = $region61
    $region60: #{tpu_custom_call.1} parent=1 // pred_region
      %s127 = ssub.s32 32, 32
      %128 = vsyncadd [#allocation15], %s127
      %s130 = sshll.u32 [#allocation16], 4
      %s131 = int_to_ptr.vmem [resolvable:$true] %s130
      %133 = dma.hbm_to_vmem [thread:$0]  %s14, 32, %s131, [#allocation15]
    $region61: #{tpu_custom_call.1} parent=1 // pred_fallthru
      _
    // Predicated region
    $region62: #{tpu_custom_call.1} parent=1 // pred_check
      _
    $region63: #{tpu_custom_call.1} parent=1 // pred_check_branch
      %135 = sbr.rel (0) target = $region65
    $region64: #{tpu_custom_call.1} parent=1 // pred_region
      %s137 = ssub.s32 16, 16
      %138 = vsyncadd [#allocation18], %s137
      %s140 = sshll.u32 [#allocation17], 4
      %s141 = int_to_ptr.vmem [resolvable:$true] %s140
      %143 = dma.hbm_to_vmem [thread:$0]  %s15, 16, %s141, [#allocation18]
    $region65: #{tpu_custom_call.1} parent=1 // pred_fallthru
      _
    // Predicated region
    $region66: #{tpu_custom_call.1} parent=1 // pred_check
      _
    $region67: #{tpu_custom_call.1} parent=1 // pred_check_branch
      %145 = sbr.rel (0) target = $region69
    $region68: #{tpu_custom_call.1} parent=1 // pred_region
      _
    $region69: #{tpu_custom_call.1} parent=1 // pred_fallthru
      _
    // Predicated region
    $region70: #{tpu_custom_call.1} parent=1 // pred_check
      _
    $region71: #{tpu_custom_call.1} parent=1 // pred_check_branch
      %147 = sbr.rel (0) target = $region73
    $region72: #{tpu_custom_call.1} parent=1 // pred_region
      _
    $region73: #{tpu_custom_call.1} parent=1 // pred_fallthru
      _
    // Predicated region
    $region74: #{tpu_custom_call.1} parent=1 // pred_check
      _
    $region75: #{tpu_custom_call.1} parent=1 // pred_check_branch
      %149 = sbr.rel (0) target = $region77
    $region76: #{tpu_custom_call.1} parent=1 // pred_region
      %150 = dma.done [#allocation3], 64
    $region77: #{tpu_custom_call.1} parent=1 // pred_fallthru
      _
    // Predicated region
    $region78: #{tpu_custom_call.1} parent=1 // pred_check
      _
    $region79: #{tpu_custom_call.1} parent=1 // pred_check_branch
      %152 = sbr.rel (0) target = $region81
    $region80: #{tpu_custom_call.1} parent=1 // pred_region
      %153 = dma.done [#allocation6], 32
    $region81: #{tpu_custom_call.1} parent=1 // pred_fallthru
      _
    // Predicated region
    $region82: #{tpu_custom_call.1} parent=1 // pred_check
      _
    $region83: #{tpu_custom_call.1} parent=1 // pred_check_branch
      %155 = sbr.rel (0) target = $region85
    $region84: #{tpu_custom_call.1} parent=1 // pred_region
      %156 = dma.done [#allocation6], 32
    $region85: #{tpu_custom_call.1} parent=1 // pred_fallthru
      _
    // Predicated region
    $region86: #{tpu_custom_call.1} parent=1 // pred_check
      _
    $region87: #{tpu_custom_call.1} parent=1 // pred_check_branch
      %158 = sbr.rel (0) target = $region89
    $region88: #{tpu_custom_call.1} parent=1 // pred_region
      %159 = dma.done [#allocation9], 96
    $region89: #{tpu_custom_call.1} parent=1 // pred_fallthru
      _
    // Predicated region
    $region90: #{tpu_custom_call.1} parent=1 // pred_check
      _
    $region91: #{tpu_custom_call.1} parent=1 // pred_check_branch
      %161 = sbr.rel (0) target = $region93
    $region92: #{tpu_custom_call.1} parent=1 // pred_region
      %162 = dma.done [#allocation9], 32
    $region93: #{tpu_custom_call.1} parent=1 // pred_fallthru
      _
    // Predicated region
    $region94: #{tpu_custom_call.1} parent=1 // pred_check
      _
    $region95: #{tpu_custom_call.1} parent=1 // pred_check_branch
      %164 = sbr.rel (0) target = $region97
    $region96: #{tpu_custom_call.1} parent=1 // pred_region
      %165 = dma.done [#allocation12], 32
    $region97: #{tpu_custom_call.1} parent=1 // pred_fallthru
      _
    // Predicated region
    $region98: #{tpu_custom_call.1} parent=1 // pred_check
      _
    $region99: #{tpu_custom_call.1} parent=1 // pred_check_branch
      %167 = sbr.rel (0) target = $region101
    $region100: #{tpu_custom_call.1} parent=1 // pred_region
      %168 = dma.done [#allocation12], 32
    $region101: #{tpu_custom_call.1} parent=1 // pred_fallthru
      _
    // Predicated region
    $region102: #{tpu_custom_call.1} parent=1 // pred_check
      _
    $region103: #{tpu_custom_call.1} parent=1 // pred_check_branch
      %170 = sbr.rel (0) target = $region105
    $region104: #{tpu_custom_call.1} parent=1 // pred_region
      %171 = dma.done [#allocation15], 32
    $region105: #{tpu_custom_call.1} parent=1 // pred_fallthru
      _
    // Predicated region
    $region106: #{tpu_custom_call.1} parent=1 // pred_check
      _
    $region107: #{tpu_custom_call.1} parent=1 // pred_check_branch
      %173 = sbr.rel (0) target = $region109
    $region108: #{tpu_custom_call.1} parent=1 // pred_region
      %174 = dma.done [#allocation15], 32
    $region109: #{tpu_custom_call.1} parent=1 // pred_fallthru
      _
    // Predicated region
    $region110: #{tpu_custom_call.1} parent=1 // pred_check
      _
    $region111: #{tpu_custom_call.1} parent=1 // pred_check_branch
      %176 = sbr.rel (0) target = $region113
    $region112: #{tpu_custom_call.1} parent=1 // pred_region
      %177 = dma.done [#allocation18], 16
    $region113: #{tpu_custom_call.1} parent=1 // pred_fallthru
      _
    %v179 = vld [vmem:[%s0] sm:$0xff]
    %v180 = vld [vmem:[%s0 + $0x8] sm:$0xff]
    %v181 = vld [vmem:[#allocation2] sm:$0xf]
    %v182 = vpack.c.bf16 %v180, %v179
    %v183 = vld [vmem:[%s2] sm:$0x1]
    %v185 = vlaneseq
    %v186 = vshrl.u32 %v185, 7
    %v187 = vsub.s32 0, %v186
    %v188 = vrot.slane %v183, %v187
    %vm190 = vcmask 64512
    %v192 = vsel %vm190, %v182, 0
    %vm194 = vcmask 1043456
    %v196 = vsel %vm194, %v181, 0
    %198 = vmatprep.subr.bf16.mxu0 0
    %199 = vmatpush1.bf16.msra.mxu0 0
    %200 = vmatprep.subr.bf16.mxu0 0
    %201 = vmatpush1.bf16.msra.mxu0 0
    %202 = vmatprep.subr.bf16.mxu0 0
    %203 = vmatpush1.bf16.msra.mxu0 0
    %204 = vmatprep.subr.bf16.mxu0 0
    %205 = vmatpush1.bf16.msra.mxu0 0
    %206 = vmatprep.subr.bf16.mxu0 0
    %207 = vmatpush1.bf16.msra.mxu0 0
    %208 = vmatprep.subr.bf16.mxu0 0
    %209 = vmatpush1.bf16.msra.mxu0 0
    %210 = vmatprep.subr.bf16.mxu0 0
    %211 = vmatpush1.bf16.msra.mxu0 0
    %212 = vmatprep.subr.bf16.mxu0 0
    %213 = vmatpush1.bf16.msra.mxu0 %v196
    %214 = vmatprep.subr.bf16.mxu0 0
    %215 = vmatpush2.bf16.msra.mxu0 0
    %216 = vmatprep.subr.bf16.mxu0 0
    %217 = vmatpush2.bf16.msra.mxu0 0
    %218 = vmatprep.subr.bf16.mxu0 0
    %219 = vmatpush2.bf16.msra.mxu0 0
    %220 = vmatprep.subr.bf16.mxu0 0
    %221 = vmatpush2.bf16.msra.mxu0 0
    %222 = vmatprep.subr.bf16.mxu0 0
    %223 = vmatpush2.bf16.msra.mxu0 0
    %224 = vmatprep.subr.bf16.mxu0 0
    %225 = vmatpush2.bf16.msra.mxu0 0
    %226 = vmatprep.subr.bf16.mxu0 0
    %227 = vmatpush2.bf16.msra.mxu0 0
    %228 = vmatprep.subr.bf16.mxu0 0
    %229 = vmatpush2.bf16.msra.mxu0 0
    %230 = vmatprep.mubr.bf16.mxu0 0
    %231 = vmatmul.mubr.bf16.gmra.mxu0 %v192
    %v232 = vpop.f32.mrf.mxu0
    %v233 = vadd.f32 %v188, %v232
    %v234 = vpop.f32.mrf.mxu0
    %v235 = vpop.f32.mrf.mxu0
    %v236 = vadd.f32 %v188, %v235
    %v237 = vpop.f32.mrf.mxu0
    %238 = vdwg.mxu0
    %v239 = vld [vmem:[#allocation5] sm:$0x1]
    %v240 = vld [vmem:[#allocation7] sm:$0x1]
    %vm241 = vcmask 261120
    %v242 = vsel %vm241, %v233, 0.0
    %243 = vadd.xlane.f32.xlu0 %v242
    %v244 = vpop.xlane.xlu0 %243
    %v245 = vsel %vm241, %v236, 0.0
    %246 = vadd.xlane.f32.xlu0 %v245
    %v247 = vpop.xlane.xlu0 %246
    %v248 = vrcp.pop 32.0
    %v249 = vmul.f32 %v244, %v248
    %v250 = vmul.f32 %v247, %v248
    %v251 = vsub.f32 %v233, %v249
    %v252 = vsub.f32 %v236, %v250
    %v253 = vmul.f32 %v251, %v251
    %v254 = vmul.f32 %v252, %v252
    %v255 = vsel %vm241, %v253, 0.0
    %256 = vadd.xlane.f32.xlu0 %v255
    %v257 = vpop.xlane.xlu0 %256
    %v258 = vsel %vm241, %v254, 0.0
    %259 = vadd.xlane.f32.xlu0 %v258
    %v260 = vpop.xlane.xlu0 %259
    %v261 = vmul.f32 %v257, %v248
    %v262 = vmul.f32 %v260, %v248
    %v263 = vadd.f32 %v261, 1e-05
    %v264 = vadd.f32 %v262, 1e-05
    %v265 = vrsqrt.pop %v263
    %v266 = vrsqrt.pop %v264
    %v267 = vmul.f32 %v251, %v265
    %v268 = vmul.f32 %v252, %v266
    %v269 = vlaneseq
    %v270 = vshrl.u32 %v269, 7
    %v271 = vsub.s32 0, %v270
    %v272 = vrot.slane %v239, %v271
    %v273 = vmul.f32 %v267, %v272
    %v274 = vmul.f32 %v268, %v272
    %v275 = vlaneseq
    %v276 = vshrl.u32 %v275, 7
    %v277 = vsub.s32 0, %v276
    %v278 = vrot.slane %v240, %v277
    %v279 = vadd.f32 %v273, %v278
    %v280 = vadd.f32 %v274, %v278
    %v281 = vld [vmem:[%s5] sm:$0xf]
    %v282 = vld [vmem:[%s5 + $0x4] sm:$0xf]
    %v283 = vld [vmem:[%s5 + $0x8] sm:$0xf]
    %v284 = vld [vmem:[%s5 + $0xc] sm:$0xf]
    %v285 = vpack.c.bf16 %v280, %v279
    %v286 = vld [vmem:[#allocation8] sm:$0x1]
    %v288 = vlaneseq
    %v289 = vshrl.u32 %v288, 7
    %v290 = vsub.s32 0, %v289
    %v291 = vrot.slane %v286, %v290
    %v297 = vunpack.c.l.b16 %v281
    %v298 = vunpack.c.l.b16 %v282
    %v299 = vunpack.c.l.b16 %v283
    %v300 = vunpack.c.l.b16 %v284
    %v301 = vpack.c.b16 %v298, %v297
    %v302 = vpack.c.b16 %v300, %v299
    %v306 = vsel %vm241, %v285, 0
    %308 = vmatprep.subr.bf16.mxu0 0
    %309 = vmatpush1.bf16.msra.mxu0 0
    %310 = vmatprep.subr.bf16.mxu0 0
    %311 = vmatpush1.bf16.msra.mxu0 0
    %312 = vmatprep.subr.bf16.mxu0 0
    %313 = vmatpush1.bf16.msra.mxu0 0
    %314 = vmatprep.subr.bf16.mxu0 0
    %315 = vmatpush1.bf16.msra.mxu0 0
    %316 = vmatprep.subr.bf16.mxu0 0
    %317 = vmatpush1.bf16.msra.mxu0 0
    %318 = vmatprep.subr.bf16.mxu0 0
    %319 = vmatpush1.bf16.msra.mxu0 0
    %320 = vmatprep.subr.bf16.mxu0 0
    %321 = vmatpush1.bf16.msra.mxu0 %v302
    %322 = vmatprep.subr.bf16.mxu0 0
    %323 = vmatpush1.bf16.msra.mxu0 %v301
    %324 = vmatprep.subr.bf16.mxu0 0
    %325 = vmatpush2.bf16.msra.mxu0 0
    %326 = vmatprep.subr.bf16.mxu0 0
    %327 = vmatpush2.bf16.msra.mxu0 0
    %328 = vmatprep.subr.bf16.mxu0 0
    %329 = vmatpush2.bf16.msra.mxu0 0
    %330 = vmatprep.subr.bf16.mxu0 0
    %331 = vmatpush2.bf16.msra.mxu0 0
    %332 = vmatprep.subr.bf16.mxu0 0
    %333 = vmatpush2.bf16.msra.mxu0 0
    %334 = vmatprep.subr.bf16.mxu0 0
    %335 = vmatpush2.bf16.msra.mxu0 0
    %336 = vmatprep.subr.bf16.mxu0 0
    %337 = vmatpush2.bf16.msra.mxu0 0
    %338 = vmatprep.subr.bf16.mxu0 0
    %339 = vmatpush2.bf16.msra.mxu0 0
    %340 = vmatprep.mubr.bf16.mxu0 0
    %341 = vmatmul.mubr.bf16.gmra.mxu0 %v306
    %v342 = vpop.f32.mrf.mxu0
    %v343 = vadd.f32 %v291, %v342
    %v344 = vpop.f32.mrf.mxu0
    %v345 = vpop.f32.mrf.mxu0
    %v346 = vadd.f32 %v291, %v345
    %v347 = vpop.f32.mrf.mxu0
    %348 = vdwg.mxu0
    %s349 = scalar_lea.vmem %s5, 16
    %v350 = vld [vmem:[%s349] sm:$0xf]
    %v351 = vld [vmem:[%s349 + $0x4] sm:$0xf]
    %v352 = vld [vmem:[%s349 + $0x8] sm:$0xf]
    %v353 = vld [vmem:[%s349 + $0xc] sm:$0xf]
    %s354 = scalar_lea.vmem [#allocation8], 1
    %v355 = vld [vmem:[%s354] sm:$0x1]
    %v357 = vlaneseq
    %v358 = vshrl.u32 %v357, 7
    %v359 = vsub.s32 0, %v358
    %v360 = vrot.slane %v355, %v359
    %v366 = vunpack.c.l.b16 %v350
    %v367 = vunpack.c.l.b16 %v351
    %v368 = vunpack.c.l.b16 %v352
    %v369 = vunpack.c.l.b16 %v353
    %v370 = vpack.c.b16 %v367, %v366
    %v371 = vpack.c.b16 %v369, %v368
    %374 = vmatprep.subr.bf16.mxu0 0
    %375 = vmatpush1.bf16.msra.mxu0 0
    %376 = vmatprep.subr.bf16.mxu0 0
    %377 = vmatpush1.bf16.msra.mxu0 0
    %378 = vmatprep.subr.bf16.mxu0 0
    %379 = vmatpush1.bf16.msra.mxu0 0
    %380 = vmatprep.subr.bf16.mxu0 0
    %381 = vmatpush1.bf16.msra.mxu0 0
    %382 = vmatprep.subr.bf16.mxu0 0
    %383 = vmatpush1.bf16.msra.mxu0 0
    %384 = vmatprep.subr.bf16.mxu0 0
    %385 = vmatpush1.bf16.msra.mxu0 0
    %386 = vmatprep.subr.bf16.mxu0 0
    %387 = vmatpush1.bf16.msra.mxu0 %v371
    %388 = vmatprep.subr.bf16.mxu0 0
    %389 = vmatpush1.bf16.msra.mxu0 %v370
    %390 = vmatprep.subr.bf16.mxu0 0
    %391 = vmatpush2.bf16.msra.mxu0 0
    %392 = vmatprep.subr.bf16.mxu0 0
    %393 = vmatpush2.bf16.msra.mxu0 0
    %394 = vmatprep.subr.bf16.mxu0 0
    %395 = vmatpush2.bf16.msra.mxu0 0
    %396 = vmatprep.subr.bf16.mxu0 0
    %397 = vmatpush2.bf16.msra.mxu0 0
    %398 = vmatprep.subr.bf16.mxu0 0
    %399 = vmatpush2.bf16.msra.mxu0 0
    %400 = vmatprep.subr.bf16.mxu0 0
    %401 = vmatpush2.bf16.msra.mxu0 0
    %402 = vmatprep.subr.bf16.mxu0 0
    %403 = vmatpush2.bf16.msra.mxu0 0
    %404 = vmatprep.subr.bf16.mxu0 0
    %405 = vmatpush2.bf16.msra.mxu0 0
    %406 = vmatprep.mubr.bf16.mxu0 0
    %407 = vmatmul.mubr.bf16.gmra.mxu0 %v306
    %v408 = vpop.f32.mrf.mxu0
    %v409 = vadd.f32 %v360, %v408
    %v410 = vpop.f32.mrf.mxu0
    %v411 = vpop.f32.mrf.mxu0
    %v412 = vadd.f32 %v360, %v411
    %v413 = vpop.f32.mrf.mxu0
    %414 = vdwg.mxu0
    %s415 = scalar_lea.vmem %s5, 32
    %v416 = vld [vmem:[%s415] sm:$0xf]
    %v417 = vld [vmem:[%s415 + $0x4] sm:$0xf]
    %v418 = vld [vmem:[%s415 + $0x8] sm:$0xf]
    %v419 = vld [vmem:[%s415 + $0xc] sm:$0xf]
    %s420 = scalar_lea.vmem [#allocation8], 2
    %v421 = vld [vmem:[%s420] sm:$0x1]
    %v423 = vlaneseq
    %v424 = vshrl.u32 %v423, 7
    %v425 = vsub.s32 0, %v424
    %v426 = vrot.slane %v421, %v425
    %v432 = vunpack.c.l.b16 %v416
    %v433 = vunpack.c.l.b16 %v417
    %v434 = vunpack.c.l.b16 %v418
    %v435 = vunpack.c.l.b16 %v419
    %v436 = vpack.c.b16 %v433, %v432
    %v437 = vpack.c.b16 %v435, %v434
    %440 = vmatprep.subr.bf16.mxu0 0
    %441 = vmatpush1.bf16.msra.mxu0 0
    %442 = vmatprep.subr.bf16.mxu0 0
    %443 = vmatpush1.bf16.msra.mxu0 0
    %444 = vmatprep.subr.bf16.mxu0 0
    %445 = vmatpush1.bf16.msra.mxu0 0
    %446 = vmatprep.subr.bf16.mxu0 0
    %447 = vmatpush1.bf16.msra.mxu0 0
    %448 = vmatprep.subr.bf16.mxu0 0
    %449 = vmatpush1.bf16.msra.mxu0 0
    %450 = vmatprep.subr.bf16.mxu0 0
    %451 = vmatpush1.bf16.msra.mxu0 0
    %452 = vmatprep.subr.bf16.mxu0 0
    %453 = vmatpush1.bf16.msra.mxu0 %v437
    %454 = vmatprep.subr.bf16.mxu0 0
    %455 = vmatpush1.bf16.msra.mxu0 %v436
    %456 = vmatprep.subr.bf16.mxu0 0
    %457 = vmatpush2.bf16.msra.mxu0 0
    %458 = vmatprep.subr.bf16.mxu0 0
    %459 = vmatpush2.bf16.msra.mxu0 0
    %460 = vmatprep.subr.bf16.mxu0 0
    %461 = vmatpush2.bf16.msra.mxu0 0
    %462 = vmatprep.subr.bf16.mxu0 0
    %463 = vmatpush2.bf16.msra.mxu0 0
    %464 = vmatprep.subr.bf16.mxu0 0
    %465 = vmatpush2.bf16.msra.mxu0 0
    %466 = vmatprep.subr.bf16.mxu0 0
    %467 = vmatpush2.bf16.msra.mxu0 0
    %468 = vmatprep.subr.bf16.mxu0 0
    %469 = vmatpush2.bf16.msra.mxu0 0
    %470 = vmatprep.subr.bf16.mxu0 0
    %471 = vmatpush2.bf16.msra.mxu0 0
    %472 = vmatprep.mubr.bf16.mxu0 0
    %473 = vmatmul.mubr.bf16.gmra.mxu0 %v306
    %v474 = vpop.f32.mrf.mxu0
    %v475 = vadd.f32 %v426, %v474
    %v476 = vpop.f32.mrf.mxu0
    %v477 = vpop.f32.mrf.mxu0
    %v478 = vadd.f32 %v426, %v477
    %v479 = vpop.f32.mrf.mxu0
    %480 = vdwg.mxu0
    %v481 = vpack.c.bf16 %v343, %v343
    %v482 = vpack.c.bf16 %v346, %v346
    %v483 = vpack.c.bf16 %v409, %v409
    %v484 = vpack.c.bf16 %v412, %v412
    %v486 = vsel %vm241, %v481, 0
    %v489 = vsel %vm241, %v483, 0
    %491 = vmatprep.subr.bf16.mxu0 0
    %492 = vmatpush1.bf16.xpose.msra.mxu0 0
    %493 = vmatprep.subr.bf16.mxu0 0
    %494 = vmatpush1.bf16.xpose.msra.mxu0 0
    %495 = vmatprep.subr.bf16.mxu0 0
    %496 = vmatpush1.bf16.xpose.msra.mxu0 0
    %497 = vmatprep.subr.bf16.mxu0 0
    %498 = vmatpush1.bf16.xpose.msra.mxu0 0
    %499 = vmatprep.subr.bf16.mxu0 0
    %500 = vmatpush1.bf16.xpose.msra.mxu0 0
    %501 = vmatprep.subr.bf16.mxu0 0
    %502 = vmatpush1.bf16.xpose.msra.mxu0 0
    %503 = vmatprep.subr.bf16.mxu0 0
    %504 = vmatpush1.bf16.xpose.msra.mxu0 0
    %505 = vmatprep.subr.bf16.mxu0 0
    %506 = vmatpush1.bf16.xpose.msra.mxu0 %v489
    %507 = vmatprep.subr.bf16.mxu0 0
    %508 = vmatpush2.bf16.xpose.msra.mxu0 0
    %509 = vmatprep.subr.bf16.mxu0 0
    %510 = vmatpush2.bf16.xpose.msra.mxu0 0
    %511 = vmatprep.subr.bf16.mxu0 0
    %512 = vmatpush2.bf16.xpose.msra.mxu0 0
    %513 = vmatprep.subr.bf16.mxu0 0
    %514 = vmatpush2.bf16.xpose.msra.mxu0 0
    %515 = vmatprep.subr.bf16.mxu0 0
    %516 = vmatpush2.bf16.xpose.msra.mxu0 0
    %517 = vmatprep.subr.bf16.mxu0 0
    %518 = vmatpush2.bf16.xpose.msra.mxu0 0
    %519 = vmatprep.subr.bf16.mxu0 0
    %520 = vmatpush2.bf16.xpose.msra.mxu0 0
    %521 = vmatprep.subr.bf16.mxu0 0
    %522 = vmatpush2.bf16.xpose.msra.mxu0 0
    %523 = vmatprep.mubr.bf16.mxu0 0
    %524 = vmatmul.mubr.bf16.gmra.mxu0 %v486
    %v525 = vpop.f32.mrf.mxu0
    %v526 = vadd.f32 0.0, %v525
    %v527 = vpop.f32.mrf.mxu0
    %v528 = vpop.f32.mrf.mxu0
    %v529 = vpop.f32.mrf.mxu0
    %530 = vdwg.mxu0
    %v532 = vsel %vm241, %v482, 0
    %v535 = vsel %vm241, %v484, 0
    %537 = vmatprep.subr.bf16.mxu0 0
    %538 = vmatpush1.bf16.xpose.msra.mxu0 0
    %539 = vmatprep.subr.bf16.mxu0 0
    %540 = vmatpush1.bf16.xpose.msra.mxu0 0
    %541 = vmatprep.subr.bf16.mxu0 0
    %542 = vmatpush1.bf16.xpose.msra.mxu0 0
    %543 = vmatprep.subr.bf16.mxu0 0
    %544 = vmatpush1.bf16.xpose.msra.mxu0 0
    %545 = vmatprep.subr.bf16.mxu0 0
    %546 = vmatpush1.bf16.xpose.msra.mxu0 0
    %547 = vmatprep.subr.bf16.mxu0 0
    %548 = vmatpush1.bf16.xpose.msra.mxu0 0
    %549 = vmatprep.subr.bf16.mxu0 0
    %550 = vmatpush1.bf16.xpose.msra.mxu0 0
    %551 = vmatprep.subr.bf16.mxu0 0
    %552 = vmatpush1.bf16.xpose.msra.mxu0 %v535
    %553 = vmatprep.subr.bf16.mxu0 0
    %554 = vmatpush2.bf16.xpose.msra.mxu0 0
    %555 = vmatprep.subr.bf16.mxu0 0
    %556 = vmatpush2.bf16.xpose.msra.mxu0 0
    %557 = vmatprep.subr.bf16.mxu0 0
    %558 = vmatpush2.bf16.xpose.msra.mxu0 0
    %559 = vmatprep.subr.bf16.mxu0 0
    %560 = vmatpush2.bf16.xpose.msra.mxu0 0
    %561 = vmatprep.subr.bf16.mxu0 0
    %562 = vmatpush2.bf16.xpose.msra.mxu0 0
    %563 = vmatprep.subr.bf16.mxu0 0
    %564 = vmatpush2.bf16.xpose.msra.mxu0 0
    %565 = vmatprep.subr.bf16.mxu0 0
    %566 = vmatpush2.bf16.xpose.msra.mxu0 0
    %567 = vmatprep.subr.bf16.mxu0 0
    %568 = vmatpush2.bf16.xpose.msra.mxu0 0
    %569 = vmatprep.mubr.bf16.mxu0 0
    %570 = vmatmul.mubr.bf16.gmra.mxu0 %v532
    %v571 = vpop.f32.mrf.mxu0
    %v572 = vadd.f32 0.0, %v571
    %v573 = vpop.f32.mrf.mxu0
    %v574 = vpop.f32.mrf.mxu0
    %v575 = vpop.f32.mrf.mxu0
    %576 = vdwg.mxu0
    %v577 = vmul.f32 %v526, 0.17677669
    %v578 = vmul.f32 %v572, 0.17677669
    %v579 = vsel %vm190, %v577, -inf
    %580 = vmax.xlane.f32.xlu0 %v579
    %v581 = vpop.xlane.xlu0 %580
    %v582 = vsel %vm190, %v578, -inf
    %583 = vmax.xlane.f32.xlu0 %v582
    %v584 = vpop.xlane.xlu0 %583
    %v585 = vsub.f32 %v577, %v581
    %v586 = vsub.f32 %v578, %v584
    %v587 = vmul.f32 %v585, 1.442695
    %v588 = vpow.pop %v587
    %v589 = vmul.f32 %v586, 1.442695
    %v590 = vpow.pop %v589
    %v591 = vsel %vm190, %v588, 0.0
    %592 = vadd.xlane.f32.xlu0 %v591
    %v593 = vpop.xlane.xlu0 %592
    %v594 = vsel %vm190, %v590, 0.0
    %595 = vadd.xlane.f32.xlu0 %v594
    %v596 = vpop.xlane.xlu0 %595
    %v597 = vrcp.pop %v593
    %v598 = vrcp.pop %v596
    %v599 = vmul.f32 %v588, %v597
    %v600 = vmul.f32 %v590, %v598
    %v601 = vpack.c.bf16 %v599, %v599
    %v602 = vpack.c.bf16 %v600, %v600
    %v603 = vpack.c.bf16 %v475, %v475
    %v604 = vpack.c.bf16 %v478, %v478
    %v606 = vsel %vm190, %v601, 0
    %v609 = vsel %vm194, %v603, 0
    %611 = vmatprep.subr.bf16.mxu0 0
    %612 = vmatpush1.bf16.msra.mxu0 0
    %613 = vmatprep.subr.bf16.mxu0 0
    %614 = vmatpush1.bf16.msra.mxu0 0
    %615 = vmatprep.subr.bf16.mxu0 0
    %616 = vmatpush1.bf16.msra.mxu0 0
    %617 = vmatprep.subr.bf16.mxu0 0
    %618 = vmatpush1.bf16.msra.mxu0 0
    %619 = vmatprep.subr.bf16.mxu0 0
    %620 = vmatpush1.bf16.msra.mxu0 0
    %621 = vmatprep.subr.bf16.mxu0 0
    %622 = vmatpush1.bf16.msra.mxu0 0
    %623 = vmatprep.subr.bf16.mxu0 0
    %624 = vmatpush1.bf16.msra.mxu0 0
    %625 = vmatprep.subr.bf16.mxu0 0
    %626 = vmatpush1.bf16.msra.mxu0 %v609
    %627 = vmatprep.subr.bf16.mxu0 0
    %628 = vmatpush2.bf16.msra.mxu0 0
    %629 = vmatprep.subr.bf16.mxu0 0
    %630 = vmatpush2.bf16.msra.mxu0 0
    %631 = vmatprep.subr.bf16.mxu0 0
    %632 = vmatpush2.bf16.msra.mxu0 0
    %633 = vmatprep.subr.bf16.mxu0 0
    %634 = vmatpush2.bf16.msra.mxu0 0
    %635 = vmatprep.subr.bf16.mxu0 0
    %636 = vmatpush2.bf16.msra.mxu0 0
    %637 = vmatprep.subr.bf16.mxu0 0
    %638 = vmatpush2.bf16.msra.mxu0 0
    %639 = vmatprep.subr.bf16.mxu0 0
    %640 = vmatpush2.bf16.msra.mxu0 0
    %641 = vmatprep.subr.bf16.mxu0 0
    %642 = vmatpush2.bf16.msra.mxu0 0
    %643 = vmatprep.mubr.bf16.mxu0 0
    %644 = vmatmul.mubr.bf16.gmra.mxu0 %v606
    %v645 = vpop.f32.mrf.mxu0
    %v646 = vadd.f32 0.0, %v645
    %v647 = vpop.f32.mrf.mxu0
    %v648 = vpop.f32.mrf.mxu0
    %v649 = vpop.f32.mrf.mxu0
    %650 = vdwg.mxu0
    %v652 = vsel %vm190, %v602, 0
    %v655 = vsel %vm194, %v604, 0
    %657 = vmatprep.subr.bf16.mxu0 0
    %658 = vmatpush1.bf16.msra.mxu0 0
    %659 = vmatprep.subr.bf16.mxu0 0
    %660 = vmatpush1.bf16.msra.mxu0 0
    %661 = vmatprep.subr.bf16.mxu0 0
    %662 = vmatpush1.bf16.msra.mxu0 0
    %663 = vmatprep.subr.bf16.mxu0 0
    %664 = vmatpush1.bf16.msra.mxu0 0
    %665 = vmatprep.subr.bf16.mxu0 0
    %666 = vmatpush1.bf16.msra.mxu0 0
    %667 = vmatprep.subr.bf16.mxu0 0
    %668 = vmatpush1.bf16.msra.mxu0 0
    %669 = vmatprep.subr.bf16.mxu0 0
    %670 = vmatpush1.bf16.msra.mxu0 0
    %671 = vmatprep.subr.bf16.mxu0 0
    %672 = vmatpush1.bf16.msra.mxu0 %v655
    %673 = vmatprep.subr.bf16.mxu0 0
    %674 = vmatpush2.bf16.msra.mxu0 0
    %675 = vmatprep.subr.bf16.mxu0 0
    %676 = vmatpush2.bf16.msra.mxu0 0
    %677 = vmatprep.subr.bf16.mxu0 0
    %678 = vmatpush2.bf16.msra.mxu0 0
    %679 = vmatprep.subr.bf16.mxu0 0
    %680 = vmatpush2.bf16.msra.mxu0 0
    %681 = vmatprep.subr.bf16.mxu0 0
    %682 = vmatpush2.bf16.msra.mxu0 0
    %683 = vmatprep.subr.bf16.mxu0 0
    %684 = vmatpush2.bf16.msra.mxu0 0
    %685 = vmatprep.subr.bf16.mxu0 0
    %686 = vmatpush2.bf16.msra.mxu0 0
    %687 = vmatprep.subr.bf16.mxu0 0
    %688 = vmatpush2.bf16.msra.mxu0 0
    %689 = vmatprep.mubr.bf16.mxu0 0
    %690 = vmatmul.mubr.bf16.gmra.mxu0 %v652
    %v691 = vpop.f32.mrf.mxu0
    %v692 = vadd.f32 0.0, %v691
    %v693 = vpop.f32.mrf.mxu0
    %v694 = vpop.f32.mrf.mxu0
    %v695 = vpop.f32.mrf.mxu0
    %696 = vdwg.mxu0
    %v697 = vld [vmem:[%s7] sm:$0xf]
    %v698 = vld [vmem:[%s7 + $0x4] sm:$0xf]
    %v699 = vld [vmem:[%s7 + $0x8] sm:$0xf]
    %v700 = vld [vmem:[%s7 + $0xc] sm:$0xf]
    %v701 = vpack.c.bf16 %v692, %v646
    %v702 = vld [vmem:[#allocation10] sm:$0x1]
    %v703 = vlaneseq
    %v704 = vshrl.u32 %v703, 7
    %v705 = vsub.s32 0, %v704
    %v706 = vrot.slane %v702, %v705
    %v711 = vunpack.c.l.b16 %v697
    %v712 = vunpack.c.l.b16 %v698
    %v713 = vunpack.c.l.b16 %v699
    %v714 = vunpack.c.l.b16 %v700
    %v715 = vpack.c.b16 %v712, %v711
    %v716 = vpack.c.b16 %v714, %v713
    %v720 = vsel %vm241, %v701, 0
    %722 = vmatprep.subr.bf16.mxu0 0
    %723 = vmatpush1.bf16.msra.mxu0 0
    %724 = vmatprep.subr.bf16.mxu0 0
    %725 = vmatpush1.bf16.msra.mxu0 0
    %726 = vmatprep.subr.bf16.mxu0 0
    %727 = vmatpush1.bf16.msra.mxu0 0
    %728 = vmatprep.subr.bf16.mxu0 0
    %729 = vmatpush1.bf16.msra.mxu0 0
    %730 = vmatprep.subr.bf16.mxu0 0
    %731 = vmatpush1.bf16.msra.mxu0 0
    %732 = vmatprep.subr.bf16.mxu0 0
    %733 = vmatpush1.bf16.msra.mxu0 0
    %734 = vmatprep.subr.bf16.mxu0 0
    %735 = vmatpush1.bf16.msra.mxu0 %v716
    %736 = vmatprep.subr.bf16.mxu0 0
    %737 = vmatpush1.bf16.msra.mxu0 %v715
    %738 = vmatprep.subr.bf16.mxu0 0
    %739 = vmatpush2.bf16.msra.mxu0 0
    %740 = vmatprep.subr.bf16.mxu0 0
    %741 = vmatpush2.bf16.msra.mxu0 0
    %742 = vmatprep.subr.bf16.mxu0 0
    %743 = vmatpush2.bf16.msra.mxu0 0
    %744 = vmatprep.subr.bf16.mxu0 0
    %745 = vmatpush2.bf16.msra.mxu0 0
    %746 = vmatprep.subr.bf16.mxu0 0
    %747 = vmatpush2.bf16.msra.mxu0 0
    %748 = vmatprep.subr.bf16.mxu0 0
    %749 = vmatpush2.bf16.msra.mxu0 0
    %750 = vmatprep.subr.bf16.mxu0 0
    %751 = vmatpush2.bf16.msra.mxu0 0
    %752 = vmatprep.subr.bf16.mxu0 0
    %753 = vmatpush2.bf16.msra.mxu0 0
    %754 = vmatprep.mubr.bf16.mxu0 0
    %755 = vmatmul.mubr.bf16.gmra.mxu0 %v720
    %v756 = vpop.f32.mrf.mxu0
    %v757 = vadd.f32 %v706, %v756
    %v758 = vpop.f32.mrf.mxu0
    %v759 = vpop.f32.mrf.mxu0
    %v760 = vadd.f32 %v706, %v759
    %v761 = vpop.f32.mrf.mxu0
    %762 = vdwg.mxu0
    %v763 = vadd.f32 %v233, %v757
    %v764 = vadd.f32 %v236, %v760
    %v765 = vld [vmem:[#allocation11] sm:$0x1]
    %v766 = vld [vmem:[#allocation13] sm:$0x1]
    %v767 = vsel %vm241, %v763, 0.0
    %768 = vadd.xlane.f32.xlu0 %v767
    %v769 = vpop.xlane.xlu0 %768
    %v770 = vsel %vm241, %v764, 0.0
    %771 = vadd.xlane.f32.xlu0 %v770
    %v772 = vpop.xlane.xlu0 %771
    %v773 = vmul.f32 %v769, %v248
    %v774 = vmul.f32 %v772, %v248
    %v775 = vsub.f32 %v763, %v773
    %v776 = vsub.f32 %v764, %v774
    %v777 = vmul.f32 %v775, %v775
    %v778 = vmul.f32 %v776, %v776
    %v779 = vsel %vm241, %v777, 0.0
    %780 = vadd.xlane.f32.xlu0 %v779
    %v781 = vpop.xlane.xlu0 %780
    %v782 = vsel %vm241, %v778, 0.0
    %783 = vadd.xlane.f32.xlu0 %v782
    %v784 = vpop.xlane.xlu0 %783
    %v785 = vmul.f32 %v781, %v248
    %v786 = vmul.f32 %v784, %v248
    %v787 = vadd.f32 %v785, 1e-05
    %v788 = vadd.f32 %v786, 1e-05
    %v789 = vrsqrt.pop %v787
    %v790 = vrsqrt.pop %v788
    %v791 = vmul.f32 %v775, %v789
    %v792 = vmul.f32 %v776, %v790
    %v793 = vlaneseq
    %v794 = vshrl.u32 %v793, 7
    %v795 = vsub.s32 0, %v794
    %v796 = vrot.slane %v765, %v795
    %v797 = vmul.f32 %v791, %v796
    %v798 = vmul.f32 %v792, %v796
    %v799 = vlaneseq
    %v800 = vshrl.u32 %v799, 7
    %v801 = vsub.s32 0, %v800
    %v802 = vrot.slane %v766, %v801
    %v803 = vadd.f32 %v797, %v802
    %v804 = vadd.f32 %v798, %v802
    %v805 = vld [vmem:[%s11] sm:$0xf]
    %v806 = vld [vmem:[%s11 + $0x4] sm:$0xf]
    %v807 = vld [vmem:[%s11 + $0x8] sm:$0xf]
    %v808 = vld [vmem:[%s11 + $0xc] sm:$0xf]
    %v809 = vpack.c.bf16 %v804, %v803
    %v810 = vld [vmem:[#allocation14] sm:$0x1]
    %v811 = vlaneseq
    %v812 = vshrl.u32 %v811, 7
    %v813 = vsub.s32 0, %v812
    %v814 = vrot.slane %v810, %v813
    %v819 = vunpack.c.l.b16 %v805
    %v820 = vunpack.c.l.b16 %v806
    %v821 = vunpack.c.l.b16 %v807
    %v822 = vunpack.c.l.b16 %v808
    %v823 = vpack.c.b16 %v820, %v819
    %v824 = vpack.c.b16 %v822, %v821
    %v828 = vsel %vm241, %v809, 0
    %830 = vmatprep.subr.bf16.mxu0 0
    %831 = vmatpush1.bf16.msra.mxu0 0
    %832 = vmatprep.subr.bf16.mxu0 0
    %833 = vmatpush1.bf16.msra.mxu0 0
    %834 = vmatprep.subr.bf16.mxu0 0
    %835 = vmatpush1.bf16.msra.mxu0 0
    %836 = vmatprep.subr.bf16.mxu0 0
    %837 = vmatpush1.bf16.msra.mxu0 0
    %838 = vmatprep.subr.bf16.mxu0 0
    %839 = vmatpush1.bf16.msra.mxu0 0
    %840 = vmatprep.subr.bf16.mxu0 0
    %841 = vmatpush1.bf16.msra.mxu0 0
    %842 = vmatprep.subr.bf16.mxu0 0
    %843 = vmatpush1.bf16.msra.mxu0 %v824
    %844 = vmatprep.subr.bf16.mxu0 0
    %845 = vmatpush1.bf16.msra.mxu0 %v823
    %846 = vmatprep.subr.bf16.mxu0 0
    %847 = vmatpush2.bf16.msra.mxu0 0
    %848 = vmatprep.subr.bf16.mxu0 0
    %849 = vmatpush2.bf16.msra.mxu0 0
    %850 = vmatprep.subr.bf16.mxu0 0
    %851 = vmatpush2.bf16.msra.mxu0 0
    %852 = vmatprep.subr.bf16.mxu0 0
    %853 = vmatpush2.bf16.msra.mxu0 0
    %854 = vmatprep.subr.bf16.mxu0 0
    %855 = vmatpush2.bf16.msra.mxu0 0
    %856 = vmatprep.subr.bf16.mxu0 0
    %857 = vmatpush2.bf16.msra.mxu0 0
    %858 = vmatprep.subr.bf16.mxu0 0
    %859 = vmatpush2.bf16.msra.mxu0 0
    %860 = vmatprep.subr.bf16.mxu0 0
    %861 = vmatpush2.bf16.msra.mxu0 0
    %862 = vmatprep.mubr.bf16.mxu0 0
    %863 = vmatmul.mubr.bf16.gmra.mxu0 %v828
    %v864 = vpop.f32.mrf.mxu0
    %v865 = vadd.f32 %v814, %v864
    %v866 = vpop.f32.mrf.mxu0
    %v867 = vpop.f32.mrf.mxu0
    %v868 = vadd.f32 %v814, %v867
    %v869 = vpop.f32.mrf.mxu0
    %870 = vdwg.mxu0
    %v871 = vmul.f32 %v865, 0.5
    %v872 = vmul.f32 %v868, 0.5
    %v873 = vmul.f32 %v865, %v865
    %v874 = vmul.f32 %v868, %v868
    %v875 = vmul.f32 %v865, %v873
    %v876 = vmul.f32 %v868, %v874
    %v877 = vmul.f32 %v875, 0.044715
    %v878 = vmul.f32 %v876, 0.044715
    %v879 = vadd.f32 %v865, %v877
    %v880 = vadd.f32 %v868, %v878
    %v881 = vmul.f32 %v879, 0.7978846
    %v882 = vmul.f32 %v880, 0.7978846
    %v883 = vtanh.pop %v881
    %v884 = vtanh.pop %v882
    %v885 = vadd.f32 %v883, 1.0
    %v886 = vadd.f32 %v884, 1.0
    %v887 = vmul.f32 %v871, %v885
    %v888 = vmul.f32 %v872, %v886
    %v889 = vld [vmem:[%s13] sm:$0xf]
    %v890 = vld [vmem:[%s13 + $0x4] sm:$0xf]
    %v891 = vld [vmem:[%s13 + $0x8] sm:$0xf]
    %v892 = vld [vmem:[%s13 + $0xc] sm:$0xf]
    %v893 = vld [vmem:[%s13 + $0x10] sm:$0xf]
    %v894 = vld [vmem:[%s13 + $0x14] sm:$0xf]
    %v895 = vld [vmem:[%s13 + $0x18] sm:$0xf]
    %v896 = vld [vmem:[%s13 + $0x1c] sm:$0xf]
    %v897 = vld [vmem:[%s13 + $0x20] sm:$0xf]
    %v898 = vld [vmem:[%s13 + $0x24] sm:$0xf]
    %v899 = vld [vmem:[%s13 + $0x28] sm:$0xf]
    %v900 = vld [vmem:[%s13 + $0x2c] sm:$0xf]
    %v901 = vld [vmem:[%s13 + $0x30] sm:$0xf]
    %v902 = vld [vmem:[%s13 + $0x34] sm:$0xf]
    %v903 = vld [vmem:[%s13 + $0x38] sm:$0xf]
    %v904 = vld [vmem:[%s13 + $0x3c] sm:$0xf]
    %v905 = vpack.c.bf16 %v888, %v887
    %v906 = vld [vmem:[#allocation16] sm:$0x1]
    %v907 = vlaneseq
    %v908 = vshrl.u32 %v907, 7
    %v909 = vsub.s32 0, %v908
    %v910 = vrot.slane %v906, %v909
    %v927 = vunpack.c.l.b16 %v889
    %v928 = vunpack.c.l.b16 %v890
    %v929 = vunpack.c.l.b16 %v891
    %v930 = vunpack.c.l.b16 %v892
    %v931 = vunpack.c.l.b16 %v893
    %v932 = vunpack.c.l.b16 %v894
    %v933 = vunpack.c.l.b16 %v895
    %v934 = vunpack.c.l.b16 %v896
    %v935 = vunpack.c.l.b16 %v897
    %v936 = vunpack.c.l.b16 %v898
    %v937 = vunpack.c.l.b16 %v899
    %v938 = vunpack.c.l.b16 %v900
    %v939 = vunpack.c.l.b16 %v901
    %v940 = vunpack.c.l.b16 %v902
    %v941 = vunpack.c.l.b16 %v903
    %v942 = vunpack.c.l.b16 %v904
    %v943 = vpack.c.b16 %v928, %v927
    %v944 = vpack.c.b16 %v930, %v929
    %v945 = vpack.c.b16 %v932, %v931
    %v946 = vpack.c.b16 %v934, %v933
    %v947 = vpack.c.b16 %v936, %v935
    %v948 = vpack.c.b16 %v938, %v937
    %v949 = vpack.c.b16 %v940, %v939
    %v950 = vpack.c.b16 %v942, %v941
    %959 = vmatprep.subr.bf16.mxu0 0
    %960 = vmatpush1.bf16.msra.mxu0 %v950
    %961 = vmatprep.subr.bf16.mxu0 0
    %962 = vmatpush1.bf16.msra.mxu0 %v949
    %963 = vmatprep.subr.bf16.mxu0 0
    %964 = vmatpush1.bf16.msra.mxu0 %v948
    %965 = vmatprep.subr.bf16.mxu0 0
    %966 = vmatpush1.bf16.msra.mxu0 %v947
    %967 = vmatprep.subr.bf16.mxu0 0
    %968 = vmatpush1.bf16.msra.mxu0 %v946
    %969 = vmatprep.subr.bf16.mxu0 0
    %970 = vmatpush1.bf16.msra.mxu0 %v945
    %971 = vmatprep.subr.bf16.mxu0 0
    %972 = vmatpush1.bf16.msra.mxu0 %v944
    %973 = vmatprep.subr.bf16.mxu0 0
    %974 = vmatpush1.bf16.msra.mxu0 %v943
    %975 = vmatprep.subr.bf16.mxu0 0
    %976 = vmatpush2.bf16.msra.mxu0 0
    %977 = vmatprep.subr.bf16.mxu0 0
    %978 = vmatpush2.bf16.msra.mxu0 0
    %979 = vmatprep.subr.bf16.mxu0 0
    %980 = vmatpush2.bf16.msra.mxu0 0
    %981 = vmatprep.subr.bf16.mxu0 0
    %982 = vmatpush2.bf16.msra.mxu0 0
    %983 = vmatprep.subr.bf16.mxu0 0
    %984 = vmatpush2.bf16.msra.mxu0 0
    %985 = vmatprep.subr.bf16.mxu0 0
    %986 = vmatpush2.bf16.msra.mxu0 0
    %987 = vmatprep.subr.bf16.mxu0 0
    %988 = vmatpush2.bf16.msra.mxu0 0
    %989 = vmatprep.subr.bf16.mxu0 0
    %990 = vmatpush2.bf16.msra.mxu0 0
    %991 = vmatprep.mubr.bf16.mxu0 0
    %992 = vmatmul.mubr.bf16.gmra.mxu0 %v905
    %v993 = vpop.f32.mrf.mxu0
    %v994 = vadd.f32 %v910, %v993
    %v995 = vpop.f32.mrf.mxu0
    %v996 = vpop.f32.mrf.mxu0
    %v997 = vadd.f32 %v910, %v996
    %v998 = vpop.f32.mrf.mxu0
    %999 = vdwg.mxu0
    %v1000 = vadd.f32 %v763, %v994
    %v1001 = vadd.f32 %v764, %v997
    %v1002 = vld [vmem:[#allocation5 + $0x1] sm:$0x1]
    %v1003 = vld [vmem:[#allocation7 + $0x1] sm:$0x1]
    %v1004 = vsel %vm241, %v1000, 0.0
    %1005 = vadd.xlane.f32.xlu0 %v1004
    %v1006 = vpop.xlane.xlu0 %1005
    %v1007 = vsel %vm241, %v1001, 0.0
    %1008 = vadd.xlane.f32.xlu0 %v1007
    %v1009 = vpop.xlane.xlu0 %1008
    %v1010 = vmul.f32 %v1006, %v248
    %v1011 = vmul.f32 %v1009, %v248
    %v1012 = vsub.f32 %v1000, %v1010
    %v1013 = vsub.f32 %v1001, %v1011
    %v1014 = vmul.f32 %v1012, %v1012
    %v1015 = vmul.f32 %v1013, %v1013
    %v1016 = vsel %vm241, %v1014, 0.0
    %1017 = vadd.xlane.f32.xlu0 %v1016
    %v1018 = vpop.xlane.xlu0 %1017
    %v1019 = vsel %vm241, %v1015, 0.0
    %1020 = vadd.xlane.f32.xlu0 %v1019
    %v1021 = vpop.xlane.xlu0 %1020
    %v1022 = vmul.f32 %v1018, %v248
    %v1023 = vmul.f32 %v1021, %v248
    %v1024 = vadd.f32 %v1022, 1e-05
    %v1025 = vadd.f32 %v1023, 1e-05
    %v1026 = vrsqrt.pop %v1024
    %v1027 = vrsqrt.pop %v1025
    %v1028 = vmul.f32 %v1012, %v1026
    %v1029 = vmul.f32 %v1013, %v1027
    %v1030 = vlaneseq
    %v1031 = vshrl.u32 %v1030, 7
    %v1032 = vsub.s32 0, %v1031
    %v1033 = vrot.slane %v1002, %v1032
    %v1034 = vmul.f32 %v1028, %v1033
    %v1035 = vmul.f32 %v1029, %v1033
    %v1036 = vlaneseq
    %v1037 = vshrl.u32 %v1036, 7
    %v1038 = vsub.s32 0, %v1037
    %v1039 = vrot.slane %v1003, %v1038
    %v1040 = vadd.f32 %v1034, %v1039
    %v1041 = vadd.f32 %v1035, %v1039
    %s1042 = scalar_lea.vmem %s5, 48
    %v1043 = vld [vmem:[%s1042] sm:$0xf]
    %v1044 = vld [vmem:[%s1042 + $0x4] sm:$0xf]
    %v1045 = vld [vmem:[%s1042 + $0x8] sm:$0xf]
    %v1046 = vld [vmem:[%s1042 + $0xc] sm:$0xf]
    %v1047 = vpack.c.bf16 %v1041, %v1040
    %s1048 = scalar_lea.vmem [#allocation8], 3
    %v1049 = vld [vmem:[%s1048] sm:$0x1]
    %v1051 = vlaneseq
    %v1052 = vshrl.u32 %v1051, 7
    %v1053 = vsub.s32 0, %v1052
    %v1054 = vrot.slane %v1049, %v1053
    %v1060 = vunpack.c.l.b16 %v1043
    %v1061 = vunpack.c.l.b16 %v1044
    %v1062 = vunpack.c.l.b16 %v1045
    %v1063 = vunpack.c.l.b16 %v1046
    %v1064 = vpack.c.b16 %v1061, %v1060
    %v1065 = vpack.c.b16 %v1063, %v1062
    %v1069 = vsel %vm241, %v1047, 0
    %1071 = vmatprep.subr.bf16.mxu0 0
    %1072 = vmatpush1.bf16.msra.mxu0 0
    %1073 = vmatprep.subr.bf16.mxu0 0
    %1074 = vmatpush1.bf16.msra.mxu0 0
    %1075 = vmatprep.subr.bf16.mxu0 0
    %1076 = vmatpush1.bf16.msra.mxu0 0
    %1077 = vmatprep.subr.bf16.mxu0 0
    %1078 = vmatpush1.bf16.msra.mxu0 0
    %1079 = vmatprep.subr.bf16.mxu0 0
    %1080 = vmatpush1.bf16.msra.mxu0 0
    %1081 = vmatprep.subr.bf16.mxu0 0
    %1082 = vmatpush1.bf16.msra.mxu0 0
    %1083 = vmatprep.subr.bf16.mxu0 0
    %1084 = vmatpush1.bf16.msra.mxu0 %v1065
    %1085 = vmatprep.subr.bf16.mxu0 0
    %1086 = vmatpush1.bf16.msra.mxu0 %v1064
    %1087 = vmatprep.subr.bf16.mxu0 0
    %1088 = vmatpush2.bf16.msra.mxu0 0
    %1089 = vmatprep.subr.bf16.mxu0 0
    %1090 = vmatpush2.bf16.msra.mxu0 0
    %1091 = vmatprep.subr.bf16.mxu0 0
    %1092 = vmatpush2.bf16.msra.mxu0 0
    %1093 = vmatprep.subr.bf16.mxu0 0
    %1094 = vmatpush2.bf16.msra.mxu0 0
    %1095 = vmatprep.subr.bf16.mxu0 0
    %1096 = vmatpush2.bf16.msra.mxu0 0
    %1097 = vmatprep.subr.bf16.mxu0 0
    %1098 = vmatpush2.bf16.msra.mxu0 0
    %1099 = vmatprep.subr.bf16.mxu0 0
    %1100 = vmatpush2.bf16.msra.mxu0 0
    %1101 = vmatprep.subr.bf16.mxu0 0
    %1102 = vmatpush2.bf16.msra.mxu0 0
    %1103 = vmatprep.mubr.bf16.mxu0 0
    %1104 = vmatmul.mubr.bf16.gmra.mxu0 %v1069
    %v1105 = vpop.f32.mrf.mxu0
    %v1106 = vadd.f32 %v1054, %v1105
    %v1107 = vpop.f32.mrf.mxu0
    %v1108 = vpop.f32.mrf.mxu0
    %v1109 = vadd.f32 %v1054, %v1108
    %v1110 = vpop.f32.mrf.mxu0
    %1111 = vdwg.mxu0
    %s1112 = scalar_lea.vmem %s5, 64
    %v1113 = vld [vmem:[%s1112] sm:$0xf]
    %v1114 = vld [vmem:[%s1112 + $0x4] sm:$0xf]
    %v1115 = vld [vmem:[%s1112 + $0x8] sm:$0xf]
    %v1116 = vld [vmem:[%s1112 + $0xc] sm:$0xf]
    %s1117 = scalar_lea.vmem [#allocation8], 4
    %v1118 = vld [vmem:[%s1117] sm:$0x1]
    %v1120 = vlaneseq
    %v1121 = vshrl.u32 %v1120, 7
    %v1122 = vsub.s32 0, %v1121
    %v1123 = vrot.slane %v1118, %v1122
    %v1129 = vunpack.c.l.b16 %v1113
    %v1130 = vunpack.c.l.b16 %v1114
    %v1131 = vunpack.c.l.b16 %v1115
    %v1132 = vunpack.c.l.b16 %v1116
    %v1133 = vpack.c.b16 %v1130, %v1129
    %v1134 = vpack.c.b16 %v1132, %v1131
    %1137 = vmatprep.subr.bf16.mxu0 0
    %1138 = vmatpush1.bf16.msra.mxu0 0
    %1139 = vmatprep.subr.bf16.mxu0 0
    %1140 = vmatpush1.bf16.msra.mxu0 0
    %1141 = vmatprep.subr.bf16.mxu0 0
    %1142 = vmatpush1.bf16.msra.mxu0 0
    %1143 = vmatprep.subr.bf16.mxu0 0
    %1144 = vmatpush1.bf16.msra.mxu0 0
    %1145 = vmatprep.subr.bf16.mxu0 0
    %1146 = vmatpush1.bf16.msra.mxu0 0
    %1147 = vmatprep.subr.bf16.mxu0 0
    %1148 = vmatpush1.bf16.msra.mxu0 0
    %1149 = vmatprep.subr.bf16.mxu0 0
    %1150 = vmatpush1.bf16.msra.mxu0 %v1134
    %1151 = vmatprep.subr.bf16.mxu0 0
    %1152 = vmatpush1.bf16.msra.mxu0 %v1133
    %1153 = vmatprep.subr.bf16.mxu0 0
    %1154 = vmatpush2.bf16.msra.mxu0 0
    %1155 = vmatprep.subr.bf16.mxu0 0
    %1156 = vmatpush2.bf16.msra.mxu0 0
    %1157 = vmatprep.subr.bf16.mxu0 0
    %1158 = vmatpush2.bf16.msra.mxu0 0
    %1159 = vmatprep.subr.bf16.mxu0 0
    %1160 = vmatpush2.bf16.msra.mxu0 0
    %1161 = vmatprep.subr.bf16.mxu0 0
    %1162 = vmatpush2.bf16.msra.mxu0 0
    %1163 = vmatprep.subr.bf16.mxu0 0
    %1164 = vmatpush2.bf16.msra.mxu0 0
    %1165 = vmatprep.subr.bf16.mxu0 0
    %1166 = vmatpush2.bf16.msra.mxu0 0
    %1167 = vmatprep.subr.bf16.mxu0 0
    %1168 = vmatpush2.bf16.msra.mxu0 0
    %1169 = vmatprep.mubr.bf16.mxu0 0
    %1170 = vmatmul.mubr.bf16.gmra.mxu0 %v1069
    %v1171 = vpop.f32.mrf.mxu0
    %v1172 = vadd.f32 %v1123, %v1171
    %v1173 = vpop.f32.mrf.mxu0
    %v1174 = vpop.f32.mrf.mxu0
    %v1175 = vadd.f32 %v1123, %v1174
    %v1176 = vpop.f32.mrf.mxu0
    %1177 = vdwg.mxu0
    %s1178 = scalar_lea.vmem %s5, 80
    %v1179 = vld [vmem:[%s1178] sm:$0xf]
    %v1180 = vld [vmem:[%s1178 + $0x4] sm:$0xf]
    %v1181 = vld [vmem:[%s1178 + $0x8] sm:$0xf]
    %v1182 = vld [vmem:[%s1178 + $0xc] sm:$0xf]
    %s1183 = scalar_lea.vmem [#allocation8], 5
    %v1184 = vld [vmem:[%s1183] sm:$0x1]
    %v1186 = vlaneseq
    %v1187 = vshrl.u32 %v1186, 7
    %v1188 = vsub.s32 0, %v1187
    %v1189 = vrot.slane %v1184, %v1188
    %v1195 = vunpack.c.l.b16 %v1179
    %v1196 = vunpack.c.l.b16 %v1180
    %v1197 = vunpack.c.l.b16 %v1181
    %v1198 = vunpack.c.l.b16 %v1182
    %v1199 = vpack.c.b16 %v1196, %v1195
    %v1200 = vpack.c.b16 %v1198, %v1197
    %1203 = vmatprep.subr.bf16.mxu0 0
    %1204 = vmatpush1.bf16.msra.mxu0 0
    %1205 = vmatprep.subr.bf16.mxu0 0
    %1206 = vmatpush1.bf16.msra.mxu0 0
    %1207 = vmatprep.subr.bf16.mxu0 0
    %1208 = vmatpush1.bf16.msra.mxu0 0
    %1209 = vmatprep.subr.bf16.mxu0 0
    %1210 = vmatpush1.bf16.msra.mxu0 0
    %1211 = vmatprep.subr.bf16.mxu0 0
    %1212 = vmatpush1.bf16.msra.mxu0 0
    %1213 = vmatprep.subr.bf16.mxu0 0
    %1214 = vmatpush1.bf16.msra.mxu0 0
    %1215 = vmatprep.subr.bf16.mxu0 0
    %1216 = vmatpush1.bf16.msra.mxu0 %v1200
    %1217 = vmatprep.subr.bf16.mxu0 0
    %1218 = vmatpush1.bf16.msra.mxu0 %v1199
    %1219 = vmatprep.subr.bf16.mxu0 0
    %1220 = vmatpush2.bf16.msra.mxu0 0
    %1221 = vmatprep.subr.bf16.mxu0 0
    %1222 = vmatpush2.bf16.msra.mxu0 0
    %1223 = vmatprep.subr.bf16.mxu0 0
    %1224 = vmatpush2.bf16.msra.mxu0 0
    %1225 = vmatprep.subr.bf16.mxu0 0
    %1226 = vmatpush2.bf16.msra.mxu0 0
    %1227 = vmatprep.subr.bf16.mxu0 0
    %1228 = vmatpush2.bf16.msra.mxu0 0
    %1229 = vmatprep.subr.bf16.mxu0 0
    %1230 = vmatpush2.bf16.msra.mxu0 0
    %1231 = vmatprep.subr.bf16.mxu0 0
    %1232 = vmatpush2.bf16.msra.mxu0 0
    %1233 = vmatprep.subr.bf16.mxu0 0
    %1234 = vmatpush2.bf16.msra.mxu0 0
    %1235 = vmatprep.mubr.bf16.mxu0 0
    %1236 = vmatmul.mubr.bf16.gmra.mxu0 %v1069
    %v1237 = vpop.f32.mrf.mxu0
    %v1238 = vadd.f32 %v1189, %v1237
    %v1239 = vpop.f32.mrf.mxu0
    %v1240 = vpop.f32.mrf.mxu0
    %v1241 = vadd.f32 %v1189, %v1240
    %v1242 = vpop.f32.mrf.mxu0
    %1243 = vdwg.mxu0
    %v1244 = vpack.c.bf16 %v1106, %v1106
    %v1245 = vpack.c.bf16 %v1109, %v1109
    %v1246 = vpack.c.bf16 %v1172, %v1172
    %v1247 = vpack.c.bf16 %v1175, %v1175
    %v1249 = vsel %vm241, %v1244, 0
    %v1252 = vsel %vm241, %v1246, 0
    %1254 = vmatprep.subr.bf16.mxu0 0
    %1255 = vmatpush1.bf16.xpose.msra.mxu0 0
    %1256 = vmatprep.subr.bf16.mxu0 0
    %1257 = vmatpush1.bf16.xpose.msra.mxu0 0
    %1258 = vmatprep.subr.bf16.mxu0 0
    %1259 = vmatpush1.bf16.xpose.msra.mxu0 0
    %1260 = vmatprep.subr.bf16.mxu0 0
    %1261 = vmatpush1.bf16.xpose.msra.mxu0 0
    %1262 = vmatprep.subr.bf16.mxu0 0
    %1263 = vmatpush1.bf16.xpose.msra.mxu0 0
    %1264 = vmatprep.subr.bf16.mxu0 0
    %1265 = vmatpush1.bf16.xpose.msra.mxu0 0
    %1266 = vmatprep.subr.bf16.mxu0 0
    %1267 = vmatpush1.bf16.xpose.msra.mxu0 0
    %1268 = vmatprep.subr.bf16.mxu0 0
    %1269 = vmatpush1.bf16.xpose.msra.mxu0 %v1252
    %1270 = vmatprep.subr.bf16.mxu0 0
    %1271 = vmatpush2.bf16.xpose.msra.mxu0 0
    %1272 = vmatprep.subr.bf16.mxu0 0
    %1273 = vmatpush2.bf16.xpose.msra.mxu0 0
    %1274 = vmatprep.subr.bf16.mxu0 0
    %1275 = vmatpush2.bf16.xpose.msra.mxu0 0
    %1276 = vmatprep.subr.bf16.mxu0 0
    %1277 = vmatpush2.bf16.xpose.msra.mxu0 0
    %1278 = vmatprep.subr.bf16.mxu0 0
    %1279 = vmatpush2.bf16.xpose.msra.mxu0 0
    %1280 = vmatprep.subr.bf16.mxu0 0
    %1281 = vmatpush2.bf16.xpose.msra.mxu0 0
    %1282 = vmatprep.subr.bf16.mxu0 0
    %1283 = vmatpush2.bf16.xpose.msra.mxu0 0
    %1284 = vmatprep.subr.bf16.mxu0 0
    %1285 = vmatpush2.bf16.xpose.msra.mxu0 0
    %1286 = vmatprep.mubr.bf16.mxu0 0
    %1287 = vmatmul.mubr.bf16.gmra.mxu0 %v1249
    %v1288 = vpop.f32.mrf.mxu0
    %v1289 = vadd.f32 0.0, %v1288
    %v1290 = vpop.f32.mrf.mxu0
    %v1291 = vpop.f32.mrf.mxu0
    %v1292 = vpop.f32.mrf.mxu0
    %1293 = vdwg.mxu0
    %v1295 = vsel %vm241, %v1245, 0
    %v1298 = vsel %vm241, %v1247, 0
    %1300 = vmatprep.subr.bf16.mxu0 0
    %1301 = vmatpush1.bf16.xpose.msra.mxu0 0
    %1302 = vmatprep.subr.bf16.mxu0 0
    %1303 = vmatpush1.bf16.xpose.msra.mxu0 0
    %1304 = vmatprep.subr.bf16.mxu0 0
    %1305 = vmatpush1.bf16.xpose.msra.mxu0 0
    %1306 = vmatprep.subr.bf16.mxu0 0
    %1307 = vmatpush1.bf16.xpose.msra.mxu0 0
    %1308 = vmatprep.subr.bf16.mxu0 0
    %1309 = vmatpush1.bf16.xpose.msra.mxu0 0
    %1310 = vmatprep.subr.bf16.mxu0 0
    %1311 = vmatpush1.bf16.xpose.msra.mxu0 0
    %1312 = vmatprep.subr.bf16.mxu0 0
    %1313 = vmatpush1.bf16.xpose.msra.mxu0 0
    %1314 = vmatprep.subr.bf16.mxu0 0
    %1315 = vmatpush1.bf16.xpose.msra.mxu0 %v1298
    %1316 = vmatprep.subr.bf16.mxu0 0
    %1317 = vmatpush2.bf16.xpose.msra.mxu0 0
    %1318 = vmatprep.subr.bf16.mxu0 0
    %1319 = vmatpush2.bf16.xpose.msra.mxu0 0
    %1320 = vmatprep.subr.bf16.mxu0 0
    %1321 = vmatpush2.bf16.xpose.msra.mxu0 0
    %1322 = vmatprep.subr.bf16.mxu0 0
    %1323 = vmatpush2.bf16.xpose.msra.mxu0 0
    %1324 = vmatprep.subr.bf16.mxu0 0
    %1325 = vmatpush2.bf16.xpose.msra.mxu0 0
    %1326 = vmatprep.subr.bf16.mxu0 0
    %1327 = vmatpush2.bf16.xpose.msra.mxu0 0
    %1328 = vmatprep.subr.bf16.mxu0 0
    %1329 = vmatpush2.bf16.xpose.msra.mxu0 0
    %1330 = vmatprep.subr.bf16.mxu0 0
    %1331 = vmatpush2.bf16.xpose.msra.mxu0 0
    %1332 = vmatprep.mubr.bf16.mxu0 0
    %1333 = vmatmul.mubr.bf16.gmra.mxu0 %v1295
    %v1334 = vpop.f32.mrf.mxu0
    %v1335 = vadd.f32 0.0, %v1334
    %v1336 = vpop.f32.mrf.mxu0
    %v1337 = vpop.f32.mrf.mxu0
    %v1338 = vpop.f32.mrf.mxu0
    %1339 = vdwg.mxu0
    %v1340 = vmul.f32 %v1289, 0.17677669
    %v1341 = vmul.f32 %v1335, 0.17677669
    %v1342 = vsel %vm190, %v1340, -inf
    %1343 = vmax.xlane.f32.xlu0 %v1342
    %v1344 = vpop.xlane.xlu0 %1343
    %v1345 = vsel %vm190, %v1341, -inf
    %1346 = vmax.xlane.f32.xlu0 %v1345
    %v1347 = vpop.xlane.xlu0 %1346
    %v1348 = vsub.f32 %v1340, %v1344
    %v1349 = vsub.f32 %v1341, %v1347
    %v1350 = vmul.f32 %v1348, 1.442695
    %v1351 = vpow.pop %v1350
    %v1352 = vmul.f32 %v1349, 1.442695
    %v1353 = vpow.pop %v1352
    %v1354 = vsel %vm190, %v1351, 0.0
    %1355 = vadd.xlane.f32.xlu0 %v1354
    %v1356 = vpop.xlane.xlu0 %1355
    %v1357 = vsel %vm190, %v1353, 0.0
    %1358 = vadd.xlane.f32.xlu0 %v1357
    %v1359 = vpop.xlane.xlu0 %1358
    %v1360 = vrcp.pop %v1356
    %v1361 = vrcp.pop %v1359
    %v1362 = vmul.f32 %v1351, %v1360
    %v1363 = vmul.f32 %v1353, %v1361
    %v1364 = vpack.c.bf16 %v1362, %v1362
    %v1365 = vpack.c.bf16 %v1363, %v1363
    %v1366 = vpack.c.bf16 %v1238, %v1238
    %v1367 = vpack.c.bf16 %v1241, %v1241
    %v1369 = vsel %vm190, %v1364, 0
    %v1372 = vsel %vm194, %v1366, 0
    %1374 = vmatprep.subr.bf16.mxu0 0
    %1375 = vmatpush1.bf16.msra.mxu0 0
    %1376 = vmatprep.subr.bf16.mxu0 0
    %1377 = vmatpush1.bf16.msra.mxu0 0
    %1378 = vmatprep.subr.bf16.mxu0 0
    %1379 = vmatpush1.bf16.msra.mxu0 0
    %1380 = vmatprep.subr.bf16.mxu0 0
    %1381 = vmatpush1.bf16.msra.mxu0 0
    %1382 = vmatprep.subr.bf16.mxu0 0
    %1383 = vmatpush1.bf16.msra.mxu0 0
    %1384 = vmatprep.subr.bf16.mxu0 0
    %1385 = vmatpush1.bf16.msra.mxu0 0
    %1386 = vmatprep.subr.bf16.mxu0 0
    %1387 = vmatpush1.bf16.msra.mxu0 0
    %1388 = vmatprep.subr.bf16.mxu0 0
    %1389 = vmatpush1.bf16.msra.mxu0 %v1372
    %1390 = vmatprep.subr.bf16.mxu0 0
    %1391 = vmatpush2.bf16.msra.mxu0 0
    %1392 = vmatprep.subr.bf16.mxu0 0
    %1393 = vmatpush2.bf16.msra.mxu0 0
    %1394 = vmatprep.subr.bf16.mxu0 0
    %1395 = vmatpush2.bf16.msra.mxu0 0
    %1396 = vmatprep.subr.bf16.mxu0 0
    %1397 = vmatpush2.bf16.msra.mxu0 0
    %1398 = vmatprep.subr.bf16.mxu0 0
    %1399 = vmatpush2.bf16.msra.mxu0 0
    %1400 = vmatprep.subr.bf16.mxu0 0
    %1401 = vmatpush2.bf16.msra.mxu0 0
    %1402 = vmatprep.subr.bf16.mxu0 0
    %1403 = vmatpush2.bf16.msra.mxu0 0
    %1404 = vmatprep.subr.bf16.mxu0 0
    %1405 = vmatpush2.bf16.msra.mxu0 0
    %1406 = vmatprep.mubr.bf16.mxu0 0
    %1407 = vmatmul.mubr.bf16.gmra.mxu0 %v1369
    %v1408 = vpop.f32.mrf.mxu0
    %v1409 = vadd.f32 0.0, %v1408
    %v1410 = vpop.f32.mrf.mxu0
    %v1411 = vpop.f32.mrf.mxu0
    %v1412 = vpop.f32.mrf.mxu0
    %1413 = vdwg.mxu0
    %v1415 = vsel %vm190, %v1365, 0
    %v1418 = vsel %vm194, %v1367, 0
    %1420 = vmatprep.subr.bf16.mxu0 0
    %1421 = vmatpush1.bf16.msra.mxu0 0
    %1422 = vmatprep.subr.bf16.mxu0 0
    %1423 = vmatpush1.bf16.msra.mxu0 0
    %1424 = vmatprep.subr.bf16.mxu0 0
    %1425 = vmatpush1.bf16.msra.mxu0 0
    %1426 = vmatprep.subr.bf16.mxu0 0
    %1427 = vmatpush1.bf16.msra.mxu0 0
    %1428 = vmatprep.subr.bf16.mxu0 0
    %1429 = vmatpush1.bf16.msra.mxu0 0
    %1430 = vmatprep.subr.bf16.mxu0 0
    %1431 = vmatpush1.bf16.msra.mxu0 0
    %1432 = vmatprep.subr.bf16.mxu0 0
    %1433 = vmatpush1.bf16.msra.mxu0 0
    %1434 = vmatprep.subr.bf16.mxu0 0
    %1435 = vmatpush1.bf16.msra.mxu0 %v1418
    %1436 = vmatprep.subr.bf16.mxu0 0
    %1437 = vmatpush2.bf16.msra.mxu0 0
    %1438 = vmatprep.subr.bf16.mxu0 0
    %1439 = vmatpush2.bf16.msra.mxu0 0
    %1440 = vmatprep.subr.bf16.mxu0 0
    %1441 = vmatpush2.bf16.msra.mxu0 0
    %1442 = vmatprep.subr.bf16.mxu0 0
    %1443 = vmatpush2.bf16.msra.mxu0 0
    %1444 = vmatprep.subr.bf16.mxu0 0
    %1445 = vmatpush2.bf16.msra.mxu0 0
    %1446 = vmatprep.subr.bf16.mxu0 0
    %1447 = vmatpush2.bf16.msra.mxu0 0
    %1448 = vmatprep.subr.bf16.mxu0 0
    %1449 = vmatpush2.bf16.msra.mxu0 0
    %1450 = vmatprep.subr.bf16.mxu0 0
    %1451 = vmatpush2.bf16.msra.mxu0 0
    %1452 = vmatprep.mubr.bf16.mxu0 0
    %1453 = vmatmul.mubr.bf16.gmra.mxu0 %v1415
    %v1454 = vpop.f32.mrf.mxu0
    %v1455 = vadd.f32 0.0, %v1454
    %v1456 = vpop.f32.mrf.mxu0
    %v1457 = vpop.f32.mrf.mxu0
    %v1458 = vpop.f32.mrf.mxu0
    %1459 = vdwg.mxu0
    %s1460 = scalar_lea.vmem %s7, 16
    %v1461 = vld [vmem:[%s1460] sm:$0xf]
    %v1462 = vld [vmem:[%s1460 + $0x4] sm:$0xf]
    %v1463 = vld [vmem:[%s1460 + $0x8] sm:$0xf]
    %v1464 = vld [vmem:[%s1460 + $0xc] sm:$0xf]
    %v1465 = vpack.c.bf16 %v1455, %v1409
    %v1466 = vld [vmem:[#allocation10 + $0x1] sm:$0x1]
    %v1467 = vlaneseq
    %v1468 = vshrl.u32 %v1467, 7
    %v1469 = vsub.s32 0, %v1468
    %v1470 = vrot.slane %v1466, %v1469
    %v1475 = vunpack.c.l.b16 %v1461
    %v1476 = vunpack.c.l.b16 %v1462
    %v1477 = vunpack.c.l.b16 %v1463
    %v1478 = vunpack.c.l.b16 %v1464
    %v1479 = vpack.c.b16 %v1476, %v1475
    %v1480 = vpack.c.b16 %v1478, %v1477
    %v1484 = vsel %vm241, %v1465, 0
    %1486 = vmatprep.subr.bf16.mxu0 0
    %1487 = vmatpush1.bf16.msra.mxu0 0
    %1488 = vmatprep.subr.bf16.mxu0 0
    %1489 = vmatpush1.bf16.msra.mxu0 0
    %1490 = vmatprep.subr.bf16.mxu0 0
    %1491 = vmatpush1.bf16.msra.mxu0 0
    %1492 = vmatprep.subr.bf16.mxu0 0
    %1493 = vmatpush1.bf16.msra.mxu0 0
    %1494 = vmatprep.subr.bf16.mxu0 0
    %1495 = vmatpush1.bf16.msra.mxu0 0
    %1496 = vmatprep.subr.bf16.mxu0 0
    %1497 = vmatpush1.bf16.msra.mxu0 0
    %1498 = vmatprep.subr.bf16.mxu0 0
    %1499 = vmatpush1.bf16.msra.mxu0 %v1480
    %1500 = vmatprep.subr.bf16.mxu0 0
    %1501 = vmatpush1.bf16.msra.mxu0 %v1479
    %1502 = vmatprep.subr.bf16.mxu0 0
    %1503 = vmatpush2.bf16.msra.mxu0 0
    %1504 = vmatprep.subr.bf16.mxu0 0
    %1505 = vmatpush2.bf16.msra.mxu0 0
    %1506 = vmatprep.subr.bf16.mxu0 0
    %1507 = vmatpush2.bf16.msra.mxu0 0
    %1508 = vmatprep.subr.bf16.mxu0 0
    %1509 = vmatpush2.bf16.msra.mxu0 0
    %1510 = vmatprep.subr.bf16.mxu0 0
    %1511 = vmatpush2.bf16.msra.mxu0 0
    %1512 = vmatprep.subr.bf16.mxu0 0
    %1513 = vmatpush2.bf16.msra.mxu0 0
    %1514 = vmatprep.subr.bf16.mxu0 0
    %1515 = vmatpush2.bf16.msra.mxu0 0
    %1516 = vmatprep.subr.bf16.mxu0 0
    %1517 = vmatpush2.bf16.msra.mxu0 0
    %1518 = vmatprep.mubr.bf16.mxu0 0
    %1519 = vmatmul.mubr.bf16.gmra.mxu0 %v1484
    %v1520 = vpop.f32.mrf.mxu0
    %v1521 = vadd.f32 %v1470, %v1520
    %v1522 = vpop.f32.mrf.mxu0
    %v1523 = vpop.f32.mrf.mxu0
    %v1524 = vadd.f32 %v1470, %v1523
    %v1525 = vpop.f32.mrf.mxu0
    %1526 = vdwg.mxu0
    %v1527 = vadd.f32 %v1000, %v1521
    %v1528 = vadd.f32 %v1001, %v1524
    %v1529 = vld [vmem:[#allocation11 + $0x1] sm:$0x1]
    %v1530 = vld [vmem:[#allocation13 + $0x1] sm:$0x1]
    %v1531 = vsel %vm241, %v1527, 0.0
    %1532 = vadd.xlane.f32.xlu0 %v1531
    %v1533 = vpop.xlane.xlu0 %1532
    %v1534 = vsel %vm241, %v1528, 0.0
    %1535 = vadd.xlane.f32.xlu0 %v1534
    %v1536 = vpop.xlane.xlu0 %1535
    %v1537 = vmul.f32 %v1533, %v248
    %v1538 = vmul.f32 %v1536, %v248
    %v1539 = vsub.f32 %v1527, %v1537
    %v1540 = vsub.f32 %v1528, %v1538
    %v1541 = vmul.f32 %v1539, %v1539
    %v1542 = vmul.f32 %v1540, %v1540
    %v1543 = vsel %vm241, %v1541, 0.0
    %1544 = vadd.xlane.f32.xlu0 %v1543
    %v1545 = vpop.xlane.xlu0 %1544
    %v1546 = vsel %vm241, %v1542, 0.0
    %1547 = vadd.xlane.f32.xlu0 %v1546
    %v1548 = vpop.xlane.xlu0 %1547
    %v1549 = vmul.f32 %v1545, %v248
    %v1550 = vmul.f32 %v1548, %v248
    %v1551 = vadd.f32 %v1549, 1e-05
    %v1552 = vadd.f32 %v1550, 1e-05
    %v1553 = vrsqrt.pop %v1551
    %v1554 = vrsqrt.pop %v1552
    %v1555 = vmul.f32 %v1539, %v1553
    %v1556 = vmul.f32 %v1540, %v1554
    %v1557 = vlaneseq
    %v1558 = vshrl.u32 %v1557, 7
    %v1559 = vsub.s32 0, %v1558
    %v1560 = vrot.slane %v1529, %v1559
    %v1561 = vmul.f32 %v1555, %v1560
    %v1562 = vmul.f32 %v1556, %v1560
    %v1563 = vlaneseq
    %v1564 = vshrl.u32 %v1563, 7
    %v1565 = vsub.s32 0, %v1564
    %v1566 = vrot.slane %v1530, %v1565
    %v1567 = vadd.f32 %v1561, %v1566
    %v1568 = vadd.f32 %v1562, %v1566
    %s1569 = scalar_lea.vmem %s11, 16
    %v1570 = vld [vmem:[%s1569] sm:$0xf]
    %v1571 = vld [vmem:[%s1569 + $0x4] sm:$0xf]
    %v1572 = vld [vmem:[%s1569 + $0x8] sm:$0xf]
    %v1573 = vld [vmem:[%s1569 + $0xc] sm:$0xf]
    %v1574 = vpack.c.bf16 %v1568, %v1567
    %v1575 = vld [vmem:[#allocation14 + $0x1] sm:$0x1]
    %v1576 = vlaneseq
    %v1577 = vshrl.u32 %v1576, 7
    %v1578 = vsub.s32 0, %v1577
    %v1579 = vrot.slane %v1575, %v1578
    %v1584 = vunpack.c.l.b16 %v1570
    %v1585 = vunpack.c.l.b16 %v1571
    %v1586 = vunpack.c.l.b16 %v1572
    %v1587 = vunpack.c.l.b16 %v1573
    %v1588 = vpack.c.b16 %v1585, %v1584
    %v1589 = vpack.c.b16 %v1587, %v1586
    %v1593 = vsel %vm241, %v1574, 0
    %1595 = vmatprep.subr.bf16.mxu0 0
    %1596 = vmatpush1.bf16.msra.mxu0 0
    %1597 = vmatprep.subr.bf16.mxu0 0
    %1598 = vmatpush1.bf16.msra.mxu0 0
    %1599 = vmatprep.subr.bf16.mxu0 0
    %1600 = vmatpush1.bf16.msra.mxu0 0
    %1601 = vmatprep.subr.bf16.mxu0 0
    %1602 = vmatpush1.bf16.msra.mxu0 0
    %1603 = vmatprep.subr.bf16.mxu0 0
    %1604 = vmatpush1.bf16.msra.mxu0 0
    %1605 = vmatprep.subr.bf16.mxu0 0
    %1606 = vmatpush1.bf16.msra.mxu0 0
    %1607 = vmatprep.subr.bf16.mxu0 0
    %1608 = vmatpush1.bf16.msra.mxu0 %v1589
    %1609 = vmatprep.subr.bf16.mxu0 0
    %1610 = vmatpush1.bf16.msra.mxu0 %v1588
    %1611 = vmatprep.subr.bf16.mxu0 0
    %1612 = vmatpush2.bf16.msra.mxu0 0
    %1613 = vmatprep.subr.bf16.mxu0 0
    %1614 = vmatpush2.bf16.msra.mxu0 0
    %1615 = vmatprep.subr.bf16.mxu0 0
    %1616 = vmatpush2.bf16.msra.mxu0 0
    %1617 = vmatprep.subr.bf16.mxu0 0
    %1618 = vmatpush2.bf16.msra.mxu0 0
    %1619 = vmatprep.subr.bf16.mxu0 0
    %1620 = vmatpush2.bf16.msra.mxu0 0
    %1621 = vmatprep.subr.bf16.mxu0 0
    %1622 = vmatpush2.bf16.msra.mxu0 0
    %1623 = vmatprep.subr.bf16.mxu0 0
    %1624 = vmatpush2.bf16.msra.mxu0 0
    %1625 = vmatprep.subr.bf16.mxu0 0
    %1626 = vmatpush2.bf16.msra.mxu0 0
    %1627 = vmatprep.mubr.bf16.mxu0 0
    %1628 = vmatmul.mubr.bf16.gmra.mxu0 %v1593
    %v1629 = vpop.f32.mrf.mxu0
    %v1630 = vadd.f32 %v1579, %v1629
    %v1631 = vpop.f32.mrf.mxu0
    %v1632 = vpop.f32.mrf.mxu0
    %v1633 = vadd.f32 %v1579, %v1632
    %v1634 = vpop.f32.mrf.mxu0
    %1635 = vdwg.mxu0
    %v1636 = vmul.f32 %v1630, 0.5
    %v1637 = vmul.f32 %v1633, 0.5
    %v1638 = vmul.f32 %v1630, %v1630
    %v1639 = vmul.f32 %v1633, %v1633
    %v1640 = vmul.f32 %v1630, %v1638
    %v1641 = vmul.f32 %v1633, %v1639
    %v1642 = vmul.f32 %v1640, 0.044715
    %v1643 = vmul.f32 %v1641, 0.044715
    %v1644 = vadd.f32 %v1630, %v1642
    %v1645 = vadd.f32 %v1633, %v1643
    %v1646 = vmul.f32 %v1644, 0.7978846
    %v1647 = vmul.f32 %v1645, 0.7978846
    %v1648 = vtanh.pop %v1646
    %v1649 = vtanh.pop %v1647
    %v1650 = vadd.f32 %v1648, 1.0
    %v1651 = vadd.f32 %v1649, 1.0
    %v1652 = vmul.f32 %v1636, %v1650
    %v1653 = vmul.f32 %v1637, %v1651
    %s1654 = scalar_lea.vmem %s13, 64
    %v1655 = vld [vmem:[%s1654] sm:$0xf]
    %v1656 = vld [vmem:[%s1654 + $0x4] sm:$0xf]
    %v1657 = vld [vmem:[%s1654 + $0x8] sm:$0xf]
    %v1658 = vld [vmem:[%s1654 + $0xc] sm:$0xf]
    %v1659 = vld [vmem:[%s1654 + $0x10] sm:$0xf]
    %v1660 = vld [vmem:[%s1654 + $0x14] sm:$0xf]
    %v1661 = vld [vmem:[%s1654 + $0x18] sm:$0xf]
    %v1662 = vld [vmem:[%s1654 + $0x1c] sm:$0xf]
    %v1663 = vld [vmem:[%s1654 + $0x20] sm:$0xf]
    %v1664 = vld [vmem:[%s1654 + $0x24] sm:$0xf]
    %v1665 = vld [vmem:[%s1654 + $0x28] sm:$0xf]
    %v1666 = vld [vmem:[%s1654 + $0x2c] sm:$0xf]
    %v1667 = vld [vmem:[%s1654 + $0x30] sm:$0xf]
    %v1668 = vld [vmem:[%s1654 + $0x34] sm:$0xf]
    %v1669 = vld [vmem:[%s1654 + $0x38] sm:$0xf]
    %v1670 = vld [vmem:[%s1654 + $0x3c] sm:$0xf]
    %v1671 = vpack.c.bf16 %v1653, %v1652
    %v1672 = vld [vmem:[#allocation16 + $0x1] sm:$0x1]
    %v1673 = vlaneseq
    %v1674 = vshrl.u32 %v1673, 7
    %v1675 = vsub.s32 0, %v1674
    %v1676 = vrot.slane %v1672, %v1675
    %v1693 = vunpack.c.l.b16 %v1655
    %v1694 = vunpack.c.l.b16 %v1656
    %v1695 = vunpack.c.l.b16 %v1657
    %v1696 = vunpack.c.l.b16 %v1658
    %v1697 = vunpack.c.l.b16 %v1659
    %v1698 = vunpack.c.l.b16 %v1660
    %v1699 = vunpack.c.l.b16 %v1661
    %v1700 = vunpack.c.l.b16 %v1662
    %v1701 = vunpack.c.l.b16 %v1663
    %v1702 = vunpack.c.l.b16 %v1664
    %v1703 = vunpack.c.l.b16 %v1665
    %v1704 = vunpack.c.l.b16 %v1666
    %v1705 = vunpack.c.l.b16 %v1667
    %v1706 = vunpack.c.l.b16 %v1668
    %v1707 = vunpack.c.l.b16 %v1669
    %v1708 = vunpack.c.l.b16 %v1670
    %v1709 = vpack.c.b16 %v1694, %v1693
    %v1710 = vpack.c.b16 %v1696, %v1695
    %v1711 = vpack.c.b16 %v1698, %v1697
    %v1712 = vpack.c.b16 %v1700, %v1699
    %v1713 = vpack.c.b16 %v1702, %v1701
    %v1714 = vpack.c.b16 %v1704, %v1703
    %v1715 = vpack.c.b16 %v1706, %v1705
    %v1716 = vpack.c.b16 %v1708, %v1707
    %1725 = vmatprep.subr.bf16.mxu0 0
    %1726 = vmatpush1.bf16.msra.mxu0 %v1716
    %1727 = vmatprep.subr.bf16.mxu0 0
    %1728 = vmatpush1.bf16.msra.mxu0 %v1715
    %1729 = vmatprep.subr.bf16.mxu0 0
    %1730 = vmatpush1.bf16.msra.mxu0 %v1714
    %1731 = vmatprep.subr.bf16.mxu0 0
    %1732 = vmatpush1.bf16.msra.mxu0 %v1713
    %1733 = vmatprep.subr.bf16.mxu0 0
    %1734 = vmatpush1.bf16.msra.mxu0 %v1712
    %1735 = vmatprep.subr.bf16.mxu0 0
    %1736 = vmatpush1.bf16.msra.mxu0 %v1711
    %1737 = vmatprep.subr.bf16.mxu0 0
    %1738 = vmatpush1.bf16.msra.mxu0 %v1710
    %1739 = vmatprep.subr.bf16.mxu0 0
    %1740 = vmatpush1.bf16.msra.mxu0 %v1709
    %1741 = vmatprep.subr.bf16.mxu0 0
    %1742 = vmatpush2.bf16.msra.mxu0 0
    %1743 = vmatprep.subr.bf16.mxu0 0
    %1744 = vmatpush2.bf16.msra.mxu0 0
    %1745 = vmatprep.subr.bf16.mxu0 0
    %1746 = vmatpush2.bf16.msra.mxu0 0
    %1747 = vmatprep.subr.bf16.mxu0 0
    %1748 = vmatpush2.bf16.msra.mxu0 0
    %1749 = vmatprep.subr.bf16.mxu0 0
    %1750 = vmatpush2.bf16.msra.mxu0 0
    %1751 = vmatprep.subr.bf16.mxu0 0
    %1752 = vmatpush2.bf16.msra.mxu0 0
    %1753 = vmatprep.subr.bf16.mxu0 0
    %1754 = vmatpush2.bf16.msra.mxu0 0
    %1755 = vmatprep.subr.bf16.mxu0 0
    %1756 = vmatpush2.bf16.msra.mxu0 0
    %1757 = vmatprep.mubr.bf16.mxu0 0
    %1758 = vmatmul.mubr.bf16.gmra.mxu0 %v1671
    %v1759 = vpop.f32.mrf.mxu0
    %v1760 = vadd.f32 %v1676, %v1759
    %v1761 = vpop.f32.mrf.mxu0
    %v1762 = vpop.f32.mrf.mxu0
    %v1763 = vadd.f32 %v1676, %v1762
    %v1764 = vpop.f32.mrf.mxu0
    %1765 = vdwg.mxu0
    %v1766 = vadd.f32 %v1527, %v1760
    %v1767 = vadd.f32 %v1528, %v1763
    %v1768 = vld [vmem:[#allocation17] sm:$0x1]
    %v1769 = vld [vmem:[%s16] sm:$0x1]
    %v1770 = vsel %vm241, %v1766, 0.0
    %1771 = vadd.xlane.f32.xlu0 %v1770
    %v1772 = vpop.xlane.xlu0 %1771
    %v1773 = vsel %vm241, %v1767, 0.0
    %1774 = vadd.xlane.f32.xlu0 %v1773
    %v1775 = vpop.xlane.xlu0 %1774
    %v1776 = vmul.f32 %v1772, %v248
    %v1777 = vmul.f32 %v1775, %v248
    %v1778 = vsub.f32 %v1766, %v1776
    %v1779 = vsub.f32 %v1767, %v1777
    %v1780 = vmul.f32 %v1778, %v1778
    %v1781 = vmul.f32 %v1779, %v1779
    %v1782 = vsel %vm241, %v1780, 0.0
    %1783 = vadd.xlane.f32.xlu0 %v1782
    %v1784 = vpop.xlane.xlu0 %1783
    %v1785 = vsel %vm241, %v1781, 0.0
    %1786 = vadd.xlane.f32.xlu0 %v1785
    %v1787 = vpop.xlane.xlu0 %1786
    %v1788 = vmul.f32 %v1784, %v248
    %v1789 = vmul.f32 %v1787, %v248
    %v1790 = vadd.f32 %v1788, 1e-05
    %v1791 = vadd.f32 %v1789, 1e-05
    %v1792 = vrsqrt.pop %v1790
    %v1793 = vrsqrt.pop %v1791
    %v1794 = vmul.f32 %v1778, %v1792
    %v1795 = vmul.f32 %v1779, %v1793
    %v1797 = vlaneseq
    %v1798 = vshrl.u32 %v1797, 7
    %v1799 = vsub.s32 0, %v1798
    %v1800 = vrot.slane %v1768, %v1799
    %v1802 = vmul.f32 %v1794, %v1800
    %v1803 = vmul.f32 %v1795, %v1800
    %v1805 = vlaneseq
    %v1806 = vshrl.u32 %v1805, 7
    %v1807 = vsub.s32 0, %v1806
    %v1808 = vrot.slane %v1769, %v1807
    %v1810 = vadd.f32 %v1802, %v1808
    %v1811 = vadd.f32 %v1803, %v1808
    %v1812 = vsel %vm241, %v1810, -inf
    %v1813 = vrot.slane %v1812, 4
    %v1814 = vmax.f32 %v1812, %v1813
    %v1815 = vrot.slane %v1814, 2
    %v1816 = vmax.f32 %v1814, %v1815
    %v1817 = vrot.slane %v1816, 1
    %v1818 = vmax.f32 %v1816, %v1817
    %v1819 = vsel %vm241, %v1811, -inf
    %v1820 = vrot.slane %v1819, 4
    %v1821 = vmax.f32 %v1819, %v1820
    %v1822 = vrot.slane %v1821, 2
    %v1823 = vmax.f32 %v1821, %v1822
    %v1824 = vrot.slane %v1823, 1
    %v1825 = vmax.f32 %v1823, %v1824
    %v1826 = vld [vmem:[%s17] sm:$0xf]
    %v1827 = vld [vmem:[%s17 + $0x4] sm:$0xf]
    %v1828 = vld [vmem:[%s17 + $0x8] sm:$0xf]
    %v1829 = vld [vmem:[%s17 + $0xc] sm:$0xf]
    %v1830 = vpack.c.bf16 %v1818, %v1818
    %v1831 = vpack.c.bf16 %v1825, %v1825
    %v1834 = vunpack.c.l.b16 %v1830
    %v1835 = vunpack.c.l.b16 %v1831
    %vm1836 = vcmask 1041409
    %v1837 = vsel %vm1836, %v1835, %v1834
    %v1838 = vpack.c.b16 %v1837, %v1837
    %v1843 = vunpack.c.l.b16 %v1826
    %v1844 = vunpack.c.l.b16 %v1827
    %v1845 = vunpack.c.l.b16 %v1828
    %v1846 = vunpack.c.l.b16 %v1829
    %v1847 = vpack.c.b16 %v1844, %v1843
    %v1848 = vpack.c.b16 %v1846, %v1845
    %v1852 = vsel %vm241, %v1838, 0
    %1854 = vmatprep.subr.bf16.mxu0 0
    %1855 = vmatpush1.bf16.msra.mxu0 0
    %1856 = vmatprep.subr.bf16.mxu0 0
    %1857 = vmatpush1.bf16.msra.mxu0 0
    %1858 = vmatprep.subr.bf16.mxu0 0
    %1859 = vmatpush1.bf16.msra.mxu0 0
    %1860 = vmatprep.subr.bf16.mxu0 0
    %1861 = vmatpush1.bf16.msra.mxu0 0
    %1862 = vmatprep.subr.bf16.mxu0 0
    %1863 = vmatpush1.bf16.msra.mxu0 0
    %1864 = vmatprep.subr.bf16.mxu0 0
    %1865 = vmatpush1.bf16.msra.mxu0 0
    %1866 = vmatprep.subr.bf16.mxu0 0
    %1867 = vmatpush1.bf16.msra.mxu0 %v1848
    %1868 = vmatprep.subr.bf16.mxu0 0
    %1869 = vmatpush1.bf16.msra.mxu0 %v1847
    %1870 = vmatprep.subr.bf16.mxu0 0
    %1871 = vmatpush2.bf16.msra.mxu0 0
    %1872 = vmatprep.subr.bf16.mxu0 0
    %1873 = vmatpush2.bf16.msra.mxu0 0
    %1874 = vmatprep.subr.bf16.mxu0 0
    %1875 = vmatpush2.bf16.msra.mxu0 0
    %1876 = vmatprep.subr.bf16.mxu0 0
    %1877 = vmatpush2.bf16.msra.mxu0 0
    %1878 = vmatprep.subr.bf16.mxu0 0
    %1879 = vmatpush2.bf16.msra.mxu0 0
    %1880 = vmatprep.subr.bf16.mxu0 0
    %1881 = vmatpush2.bf16.msra.mxu0 0
    %1882 = vmatprep.subr.bf16.mxu0 0
    %1883 = vmatpush2.bf16.msra.mxu0 0
    %1884 = vmatprep.subr.bf16.mxu0 0
    %1885 = vmatpush2.bf16.msra.mxu0 0
    %1886 = vmatprep.mubr.bf16.mxu0 0
    %1887 = vmatmul.mubr.bf16.gmra.mxu0 %v1852
    %v1888 = vpop.f32.mrf.mxu0
    %v1889 = vadd.f32 0.0, %v1888
    %v1890 = vpop.f32.mrf.mxu0
    %v1891 = vpop.f32.mrf.mxu0
    %v1892 = vpop.f32.mrf.mxu0
    %1893 = vdwg.mxu0
    %v1894 = vlaneseq
    %v1895 = vand.u32 %v1894, 127
    %vm1896 = vcmp.lt.s32.totalorder %v1895, 4
    %v1897 = vsel %vm1896, 0.0, %v1889
    %v1898 = vmul.f32 %v1897, 0.5
    %v1899 = vmul.f32 %v1898, 1.442695
    %v1900 = vpow.pop %v1899
    %v1901 = vsel %vm1896, %v1889, %v1900
    %1902 = vst [vmem:[#allocation19] sm:$0x3] %v1901
    // Predicated region
    $region114: #{tpu_custom_call.1} parent=1 // pred_check
      _
    $region115: #{tpu_custom_call.1} parent=1 // pred_check_branch
      %1904 = sbr.rel (0) target = $region117
    $region116: #{tpu_custom_call.1} parent=1 // pred_region
      %s1906 = ssub.s32 32, 32
      %1907 = vsyncadd [#allocation4], %s1906
      %s1909 = sshll.u32 [#allocation19], 4
      %s1910 = int_to_ptr.vmem [resolvable:$true] %s1909
      %1912 = dma.vmem_to_hbm [thread:$0]  %s1910, 32, %s18, [#allocation4]
    $region117: #{tpu_custom_call.1} parent=1 // pred_fallthru
      _
    // Predicated region
    $region118: #{tpu_custom_call.1} parent=1 // pred_check
      _
    $region119: #{tpu_custom_call.1} parent=1 // pred_check_branch
      %1914 = sbr.rel (0) target = $region121
    $region120: #{tpu_custom_call.1} parent=1 // pred_region
      %1915 = dma.done [#allocation4], 32
    $region121: #{tpu_custom_call.1} parent=1 // pred_fallthru
      _
    %1916 = vsyncpa [#allocation3], 1
    %1917 = vsyncpa [#allocation6], 1
    %1918 = vsyncpa [#allocation9], 1
    %1919 = vsyncpa [#allocation12], 1
    %1920 = vsyncpa [#allocation15], 1
    %1921 = vsyncpa [#allocation18], 1
    %1922 = vsyncpa [#allocation4], 1

</llo_original>
